<compile_context>
chip_gen: v7x
topology: tpu7x:2x2x1
jax: 0.10.0
libtpu: 0.0.40
codegen_flags: <defaults>
</compile_context>

<pallas_src>
import functools

import numpy as np
import jax
import jax.numpy as jnp
from jax.experimental import pallas as pl
from jax.experimental.pallas import tpu as pltpu


N_LAYERS = 6      # 5 GCN convs + final Linear
PAD = 128         # lane-dense feature slab width
NODE_TILE = 128   # node count padded up to a multiple of this


# ----------------------------- Pallas kernel ------------------------------- #

def _net_kernel(a_ref, x_ref, w_ref, b_ref, o_ref):
    """Fused forward pass (all operands resident in VMEM, no grid).

    a_ref: (Np, Np)       bf16  normalized adjacency A_hat (zero padded)
    x_ref: (Np, PAD)      bf16  zero-padded node features
    w_ref: (6, PAD, PAD)  bf16  zero-padded layer weights
    b_ref: (6, 1, PAD)    f32   zero-padded layer biases
    o_ref: (Np, PAD)      bf16  padded logits (first num_classes cols valid)
    """
    h = x_ref[...]                                              # bf16
    # 5 GCN convs:  relu(A_hat @ (H @ W_l) + b_l)   (bf16 MXU, f32 accum)
    for l in range(N_LAYERS - 1):
        hw = jnp.dot(h, w_ref[l], preferred_element_type=jnp.float32)
        agg = jnp.dot(a_ref[...], hw.astype(jnp.bfloat16),
                      preferred_element_type=jnp.float32)
        h = jnp.maximum(agg + b_ref[l], 0.0).astype(jnp.bfloat16)
    # Final Linear: no aggregation, no activation.
    out = jnp.dot(h, w_ref[N_LAYERS - 1], preferred_element_type=jnp.float32)
    o_ref[...] = (out + b_ref[N_LAYERS - 1]).astype(o_ref.dtype)


# ------------------------- One-time setup (hoisted) ------------------------ #

def prepare_slabs(params):
    """Pad weights/biases to 128-wide slabs. Done ONCE, host-side numpy."""
    assert len(params) == N_LAYERS
    w_slab = np.zeros((N_LAYERS, PAD, PAD), np.float32)
    b_slab = np.zeros((N_LAYERS, 1, PAD), np.float32)
    for l, (w, b) in enumerate(params):
        fi, fo = w.shape
        w_slab[l, :fi, :fo] = np.asarray(w)
        b_slab[l, :, :fo] = np.asarray(b)
    return jnp.asarray(w_slab, dtype=jnp.bfloat16), jnp.asarray(b_slab)


def pad_graph(x, a_hat):
    """Pad node/feature dims to (8,128)-aligned bf16 slabs. Done ONCE."""
    n, f_in = x.shape
    n_pad = ((n + NODE_TILE - 1) // NODE_TILE) * NODE_TILE
    x_pad = jnp.zeros((n_pad, PAD), jnp.bfloat16).at[:n, :f_in].set(
        x.astype(jnp.bfloat16))
    a_pad = jnp.zeros((n_pad, n_pad), jnp.bfloat16).at[:n, :n].set(
        a_hat.astype(jnp.bfloat16))
    return a_pad, x_pad


# ------------------------------ Jitted forward ----------------------------- #

@functools.partial(jax.jit, static_argnames=("num_nodes", "num_classes"))
def net_forward(a_pad, x_pad, w_slab, b_slab, *, num_nodes, num_classes):
    """Per-call path: just the fused kernel + a static slice."""
    n_pad = a_pad.shape[0]
    flops = 2 * n_pad * PAD * (5 * n_pad + N_LAYERS * PAD)
    bytes_accessed = int(a_pad.size * 2 + x_pad.size * 2 + w_slab.size * 2
                         + b_slab.size * 4 + n_pad * PAD * 2)
    out_pad = pl.pallas_call(
        _net_kernel,
        out_shape=jax.ShapeDtypeStruct((n_pad, PAD), jnp.bfloat16),
        in_specs=[pl.BlockSpec(memory_space=pltpu.MemorySpace.VMEM)] * 4,
        out_specs=pl.BlockSpec(memory_space=pltpu.MemorySpace.VMEM),
        compiler_params=pltpu.CompilerParams(vmem_limit_bytes=32 << 20),
        cost_estimate=pl.CostEstimate(flops=int(flops), transcendentals=0,
                                      bytes_accessed=bytes_accessed),
    )(a_pad, x_pad, w_slab, b_slab)
    return out_pad[:num_nodes, :num_classes].astype(jnp.float32)


# ------------------------------- Glue (JAX) -------------------------------- #

def build_a_hat(edge_index, num_nodes):
    """Dense normalized adjacency D^-1/2 (A + I) D^-1/2 (GCNConv default).

    Duplicate edges are summed; self-loops are added only to nodes missing one
    (PyG add_remaining_self_loops semantics).
    """
    src, dst = edge_index
    a = jnp.zeros((num_nodes, num_nodes), jnp.float32).at[dst, src].add(1.0)
    diag = jnp.diag(a)
    a = a + jnp.diag(jnp.where(diag > 0, 0.0, 1.0))
    deg = a.sum(axis=1)
    d_inv_sqrt = jnp.where(deg > 0, 1.0 / jnp.sqrt(deg), 0.0)
    return d_inv_sqrt[:, None] * a * d_inv_sqrt[None, :]


def init_params(key, dims):
    """Deterministic glorot-ish init for each (f_in -> f_out) layer."""
    params = []
    for f_in, f_out in dims:
        key, wk = jax.random.split(key)
        scale = jnp.sqrt(2.0 / (f_in + f_out))
        w = jax.random.normal(wk, (f_in, f_out), jnp.float32) * scale
        b = jnp.zeros((1, f_out), jnp.float32)
        params.append((w, b))
    return params


def net_forward_ref(x, a_hat, params):
    """Pure-JAX f32 reference (same math as the PyTorch module)."""
    h = x
    for w, b in params[:-1]:
        h = jnp.maximum(a_hat @ (h @ w) + b, 0.0)
    w, b = params[-1]
    return h @ w + b


# --------------------------------- Driver ---------------------------------- #

if __name__ == "__main__":
    key = jax.random.PRNGKey(0)

    # Graph matching the module's spec: 197 nodes, 4 classes.
    N = 197
    F_IN = 16
    NUM_CLASSES = 4

    nodes = jnp.arange(N, dtype=jnp.int32)
    src = jnp.concatenate([nodes, (nodes + 1) % N])
    dst = jnp.concatenate([(nodes + 1) % N, nodes])
    edge_index = jnp.stack([src, dst], axis=0)

    key, xk, pk = jax.random.split(key, 3)
    x = jax.random.normal(xk, (N, F_IN), jnp.float32)
    a_hat = build_a_hat(edge_index, N)

    # Layer dims mirror the PyTorch module: F_IN -> 85 -> 80 -> 50 -> 30 ->
    # 20 -> num_classes.
    dims = [(F_IN, 85), (85, 80), (80, 50), (50, 30), (30, 20),
            (20, NUM_CLASSES)]
    params = init_params(pk, dims)

    # One-time setup (hoisted out of the per-call path).
    w_slab, b_slab = prepare_slabs(params)
    a_pad, x_pad = pad_graph(x, a_hat)

    out = net_forward(a_pad, x_pad, w_slab, b_slab,
                      num_nodes=N, num_classes=NUM_CLASSES)
    out = jax.block_until_ready(out)

    ref = net_forward_ref(x, a_hat, params)
    assert out.shape == (N, NUM_CLASSES)
    # bf16 MXU inputs / bf16 output with f32 accumulation -> loosened
    # tolerance vs the pure-f32 reference.
    assert jnp.allclose(out, ref, atol=3e-2, rtol=5e-2), (
        float(jnp.max(jnp.abs(out - ref))))

    print("KERNEL_OK")
</pallas_src>

<mosaic_0001>
module attributes {stable_mosaic.version = 11 : i64} {
  func.func @_net_kernel(%arg0: memref<256x256xbf16, #tpu.memory_space<vmem>>, %arg1: memref<256x128xbf16, #tpu.memory_space<vmem>>, %arg2: memref<6x128x128xbf16, #tpu.memory_space<vmem>>, %arg3: memref<6x1x128xf32, #tpu.memory_space<vmem>>, %arg4: memref<256x128xbf16, #tpu.memory_space<vmem>>) attributes {dimension_semantics = [], scalar_prefetch = 0 : i64, scratch_operands = 0 : i64, tpu.core_type = #tpu.core_type<tc>} {
    %c0 = arith.constant 0 : index
    %c0_0 = arith.constant 0 : index
    %0 = vector.load %arg1[%c0, %c0_0] : memref<256x128xbf16, #tpu.memory_space<vmem>>, vector<256x128xbf16>
    %c0_1 = arith.constant 0 : index
    %c0_2 = arith.constant 0 : index
    %c0_3 = arith.constant 0 : index
    %1 = vector.load %arg2[%c0_1, %c0_2, %c0_3] : memref<6x128x128xbf16, #tpu.memory_space<vmem>>, vector<1x128x128xbf16>
    %2 = vector.shape_cast %1 : vector<1x128x128xbf16> to vector<128x128xbf16>
    %cst = arith.constant dense<0.000000e+00> : vector<256x128xf32>
    %3 = tpu.matmul %0, %2, %cst {dimension_numbers = #tpu.dot_dimension_numbers<[1], [0], [0], [1], [0, 0, 1, 1], [], []>} : vector<256x128xbf16>, vector<128x128xbf16>, vector<256x128xf32> -> vector<256x128xf32>
    %c0_4 = arith.constant 0 : index
    %c0_5 = arith.constant 0 : index
    %4 = vector.load %arg0[%c0_4, %c0_5] : memref<256x256xbf16, #tpu.memory_space<vmem>>, vector<256x256xbf16>
    %5 = arith.truncf %3 : vector<256x128xf32> to vector<256x128xbf16>
    %cst_6 = arith.constant dense<0.000000e+00> : vector<256x128xf32>
    %6 = tpu.matmul %4, %5, %cst_6 {dimension_numbers = #tpu.dot_dimension_numbers<[1], [0], [0], [1], [0, 0, 1, 1], [], []>} : vector<256x256xbf16>, vector<256x128xbf16>, vector<256x128xf32> -> vector<256x128xf32>
    %c0_7 = arith.constant 0 : index
    %c0_8 = arith.constant 0 : index
    %c0_9 = arith.constant 0 : index
    %7 = vector.load %arg3[%c0_7, %c0_8, %c0_9] : memref<6x1x128xf32, #tpu.memory_space<vmem>>, vector<1x1x128xf32>
    %8 = vector.shape_cast %7 : vector<1x1x128xf32> to vector<1x128xf32>
    %9 = vector.broadcast %8 : vector<1x128xf32> to vector<256x128xf32>
    %10 = arith.addf %6, %9 : vector<256x128xf32>
    %cst_10 = arith.constant 0.000000e+00 : f32
    %11 = vector.broadcast %cst_10 : f32 to vector<256x128xf32>
    %12 = arith.maximumf %10, %11 : vector<256x128xf32>
    %13 = arith.truncf %12 : vector<256x128xf32> to vector<256x128xbf16>
    %c1 = arith.constant 1 : index
    %c0_11 = arith.constant 0 : index
    %c0_12 = arith.constant 0 : index
    %14 = vector.load %arg2[%c1, %c0_11, %c0_12] : memref<6x128x128xbf16, #tpu.memory_space<vmem>>, vector<1x128x128xbf16>
    %15 = vector.shape_cast %14 : vector<1x128x128xbf16> to vector<128x128xbf16>
    %cst_13 = arith.constant dense<0.000000e+00> : vector<256x128xf32>
    %16 = tpu.matmul %13, %15, %cst_13 {dimension_numbers = #tpu.dot_dimension_numbers<[1], [0], [0], [1], [0, 0, 1, 1], [], []>} : vector<256x128xbf16>, vector<128x128xbf16>, vector<256x128xf32> -> vector<256x128xf32>
    %c0_14 = arith.constant 0 : index
    %c0_15 = arith.constant 0 : index
    %17 = vector.load %arg0[%c0_14, %c0_15] : memref<256x256xbf16, #tpu.memory_space<vmem>>, vector<256x256xbf16>
    %18 = arith.truncf %16 : vector<256x128xf32> to vector<256x128xbf16>
    %cst_16 = arith.constant dense<0.000000e+00> : vector<256x128xf32>
    %19 = tpu.matmul %17, %18, %cst_16 {dimension_numbers = #tpu.dot_dimension_numbers<[1], [0], [0], [1], [0, 0, 1, 1], [], []>} : vector<256x256xbf16>, vector<256x128xbf16>, vector<256x128xf32> -> vector<256x128xf32>
    %c1_17 = arith.constant 1 : index
    %c0_18 = arith.constant 0 : index
    %c0_19 = arith.constant 0 : index
    %20 = vector.load %arg3[%c1_17, %c0_18, %c0_19] : memref<6x1x128xf32, #tpu.memory_space<vmem>>, vector<1x1x128xf32>
    %21 = vector.shape_cast %20 : vector<1x1x128xf32> to vector<1x128xf32>
    %22 = vector.broadcast %21 : vector<1x128xf32> to vector<256x128xf32>
    %23 = arith.addf %19, %22 : vector<256x128xf32>
    %cst_20 = arith.constant 0.000000e+00 : f32
    %24 = vector.broadcast %cst_20 : f32 to vector<256x128xf32>
    %25 = arith.maximumf %23, %24 : vector<256x128xf32>
    %26 = arith.truncf %25 : vector<256x128xf32> to vector<256x128xbf16>
    %c2 = arith.constant 2 : index
    %c0_21 = arith.constant 0 : index
    %c0_22 = arith.constant 0 : index
    %27 = vector.load %arg2[%c2, %c0_21, %c0_22] : memref<6x128x128xbf16, #tpu.memory_space<vmem>>, vector<1x128x128xbf16>
    %28 = vector.shape_cast %27 : vector<1x128x128xbf16> to vector<128x128xbf16>
    %cst_23 = arith.constant dense<0.000000e+00> : vector<256x128xf32>
    %29 = tpu.matmul %26, %28, %cst_23 {dimension_numbers = #tpu.dot_dimension_numbers<[1], [0], [0], [1], [0, 0, 1, 1], [], []>} : vector<256x128xbf16>, vector<128x128xbf16>, vector<256x128xf32> -> vector<256x128xf32>
    %c0_24 = arith.constant 0 : index
    %c0_25 = arith.constant 0 : index
    %30 = vector.load %arg0[%c0_24, %c0_25] : memref<256x256xbf16, #tpu.memory_space<vmem>>, vector<256x256xbf16>
    %31 = arith.truncf %29 : vector<256x128xf32> to vector<256x128xbf16>
    %cst_26 = arith.constant dense<0.000000e+00> : vector<256x128xf32>
    %32 = tpu.matmul %30, %31, %cst_26 {dimension_numbers = #tpu.dot_dimension_numbers<[1], [0], [0], [1], [0, 0, 1, 1], [], []>} : vector<256x256xbf16>, vector<256x128xbf16>, vector<256x128xf32> -> vector<256x128xf32>
    %c2_27 = arith.constant 2 : index
    %c0_28 = arith.constant 0 : index
    %c0_29 = arith.constant 0 : index
    %33 = vector.load %arg3[%c2_27, %c0_28, %c0_29] : memref<6x1x128xf32, #tpu.memory_space<vmem>>, vector<1x1x128xf32>
    %34 = vector.shape_cast %33 : vector<1x1x128xf32> to vector<1x128xf32>
    %35 = vector.broadcast %34 : vector<1x128xf32> to vector<256x128xf32>
    %36 = arith.addf %32, %35 : vector<256x128xf32>
    %cst_30 = arith.constant 0.000000e+00 : f32
    %37 = vector.broadcast %cst_30 : f32 to vector<256x128xf32>
    %38 = arith.maximumf %36, %37 : vector<256x128xf32>
    %39 = arith.truncf %38 : vector<256x128xf32> to vector<256x128xbf16>
    %c3 = arith.constant 3 : index
    %c0_31 = arith.constant 0 : index
    %c0_32 = arith.constant 0 : index
    %40 = vector.load %arg2[%c3, %c0_31, %c0_32] : memref<6x128x128xbf16, #tpu.memory_space<vmem>>, vector<1x128x128xbf16>
    %41 = vector.shape_cast %40 : vector<1x128x128xbf16> to vector<128x128xbf16>
    %cst_33 = arith.constant dense<0.000000e+00> : vector<256x128xf32>
    %42 = tpu.matmul %39, %41, %cst_33 {dimension_numbers = #tpu.dot_dimension_numbers<[1], [0], [0], [1], [0, 0, 1, 1], [], []>} : vector<256x128xbf16>, vector<128x128xbf16>, vector<256x128xf32> -> vector<256x128xf32>
    %c0_34 = arith.constant 0 : index
    %c0_35 = arith.constant 0 : index
    %43 = vector.load %arg0[%c0_34, %c0_35] : memref<256x256xbf16, #tpu.memory_space<vmem>>, vector<256x256xbf16>
    %44 = arith.truncf %42 : vector<256x128xf32> to vector<256x128xbf16>
    %cst_36 = arith.constant dense<0.000000e+00> : vector<256x128xf32>
    %45 = tpu.matmul %43, %44, %cst_36 {dimension_numbers = #tpu.dot_dimension_numbers<[1], [0], [0], [1], [0, 0, 1, 1], [], []>} : vector<256x256xbf16>, vector<256x128xbf16>, vector<256x128xf32> -> vector<256x128xf32>
    %c3_37 = arith.constant 3 : index
    %c0_38 = arith.constant 0 : index
    %c0_39 = arith.constant 0 : index
    %46 = vector.load %arg3[%c3_37, %c0_38, %c0_39] : memref<6x1x128xf32, #tpu.memory_space<vmem>>, vector<1x1x128xf32>
    %47 = vector.shape_cast %46 : vector<1x1x128xf32> to vector<1x128xf32>
    %48 = vector.broadcast %47 : vector<1x128xf32> to vector<256x128xf32>
    %49 = arith.addf %45, %48 : vector<256x128xf32>
    %cst_40 = arith.constant 0.000000e+00 : f32
    %50 = vector.broadcast %cst_40 : f32 to vector<256x128xf32>
    %51 = arith.maximumf %49, %50 : vector<256x128xf32>
    %52 = arith.truncf %51 : vector<256x128xf32> to vector<256x128xbf16>
    %c4 = arith.constant 4 : index
    %c0_41 = arith.constant 0 : index
    %c0_42 = arith.constant 0 : index
    %53 = vector.load %arg2[%c4, %c0_41, %c0_42] : memref<6x128x128xbf16, #tpu.memory_space<vmem>>, vector<1x128x128xbf16>
    %54 = vector.shape_cast %53 : vector<1x128x128xbf16> to vector<128x128xbf16>
    %cst_43 = arith.constant dense<0.000000e+00> : vector<256x128xf32>
    %55 = tpu.matmul %52, %54, %cst_43 {dimension_numbers = #tpu.dot_dimension_numbers<[1], [0], [0], [1], [0, 0, 1, 1], [], []>} : vector<256x128xbf16>, vector<128x128xbf16>, vector<256x128xf32> -> vector<256x128xf32>
    %c0_44 = arith.constant 0 : index
    %c0_45 = arith.constant 0 : index
    %56 = vector.load %arg0[%c0_44, %c0_45] : memref<256x256xbf16, #tpu.memory_space<vmem>>, vector<256x256xbf16>
    %57 = arith.truncf %55 : vector<256x128xf32> to vector<256x128xbf16>
    %cst_46 = arith.constant dense<0.000000e+00> : vector<256x128xf32>
    %58 = tpu.matmul %56, %57, %cst_46 {dimension_numbers = #tpu.dot_dimension_numbers<[1], [0], [0], [1], [0, 0, 1, 1], [], []>} : vector<256x256xbf16>, vector<256x128xbf16>, vector<256x128xf32> -> vector<256x128xf32>
    %c4_47 = arith.constant 4 : index
    %c0_48 = arith.constant 0 : index
    %c0_49 = arith.constant 0 : index
    %59 = vector.load %arg3[%c4_47, %c0_48, %c0_49] : memref<6x1x128xf32, #tpu.memory_space<vmem>>, vector<1x1x128xf32>
    %60 = vector.shape_cast %59 : vector<1x1x128xf32> to vector<1x128xf32>
    %61 = vector.broadcast %60 : vector<1x128xf32> to vector<256x128xf32>
    %62 = arith.addf %58, %61 : vector<256x128xf32>
    %cst_50 = arith.constant 0.000000e+00 : f32
    %63 = vector.broadcast %cst_50 : f32 to vector<256x128xf32>
    %64 = arith.maximumf %62, %63 : vector<256x128xf32>
    %65 = arith.truncf %64 : vector<256x128xf32> to vector<256x128xbf16>
    %c5 = arith.constant 5 : index
    %c0_51 = arith.constant 0 : index
    %c0_52 = arith.constant 0 : index
    %66 = vector.load %arg2[%c5, %c0_51, %c0_52] : memref<6x128x128xbf16, #tpu.memory_space<vmem>>, vector<1x128x128xbf16>
    %67 = vector.shape_cast %66 : vector<1x128x128xbf16> to vector<128x128xbf16>
    %cst_53 = arith.constant dense<0.000000e+00> : vector<256x128xf32>
    %68 = tpu.matmul %65, %67, %cst_53 {dimension_numbers = #tpu.dot_dimension_numbers<[1], [0], [0], [1], [0, 0, 1, 1], [], []>} : vector<256x128xbf16>, vector<128x128xbf16>, vector<256x128xf32> -> vector<256x128xf32>
    %c5_54 = arith.constant 5 : index
    %c0_55 = arith.constant 0 : index
    %c0_56 = arith.constant 0 : index
    %69 = vector.load %arg3[%c5_54, %c0_55, %c0_56] : memref<6x1x128xf32, #tpu.memory_space<vmem>>, vector<1x1x128xf32>
    %70 = vector.shape_cast %69 : vector<1x1x128xf32> to vector<1x128xf32>
    %71 = vector.broadcast %70 : vector<1x128xf32> to vector<256x128xf32>
    %72 = arith.addf %68, %71 : vector<256x128xf32>
    %73 = arith.truncf %72 : vector<256x128xf32> to vector<256x128xbf16>
    %c0_57 = arith.constant 0 : index
    %c0_58 = arith.constant 0 : index
    %74 = vector.load %arg4[%c0_57, %c0_58] : memref<256x128xbf16, #tpu.memory_space<vmem>>, vector<256x128xbf16>
    tpu.vector_store %arg4[%c0_57, %c0_58], %73 {strides = array<i32>} : memref<256x128xbf16, #tpu.memory_space<vmem>>, vector<256x128xbf16>,
    return
  }
}

</mosaic_0001>

<llo_original>
// kernel: net_forward.1
$region0: #{net_forward.1}
  #allocation0 [shape = 'u32[]', space=smem, size = 0x4, offset = 0x4, fixed_abs, tag = 'smem constant byte address 0x4 - core index']
  #allocation1 [shape = 'u32[144,128]{1,0:T(1,128)}', space=vmem, size = 0x12000, scoped, tag = 'internal scratch']
  %s0 = inlined_call_operand.hbm [shape: bf16[256,256], index: 0, kind: input, shape index: {}]
  %s1 = inlined_call_operand.hbm [shape: bf16[256,128], index: 1, kind: input, shape index: {}]
  %s2 = inlined_call_operand.hbm [shape: bf16[6,128,128], index: 2, kind: input, shape index: {}]
  %s3 = inlined_call_operand.vmem [shape: f32[6,1,128], index: 3, kind: input, shape index: {}]
  %s4 = inlined_call_operand.vmem [shape: bf16[256,128], index: 4, kind: output, shape index: {}]
  %s5 = sld [smem:[#allocation0]]
  $region38: #{net_forward.1} parent=0
    _
  %s7 = ssub.s32 1, %s5
  %s8 = scalar_select 0, %s7, %s5
  $region1: #{net_forward.1} parent=0
    #allocation2 [shape = 'u8[131072]{0}', space=vmem, size = 0x20000, scoped, tag = 'input window, operand 0, single buffered']
    #allocation3 [shape = 's32[1]{0}', space=sflag, size = 0x4, scoped, tag = 'scoped memory for net_forward.1']
    #allocation4 [shape = 'u8[65536]{0}', space=vmem, size = 0x10000, scoped, tag = 'input window, operand 1, single buffered']
    #allocation5 [shape = 's32[1]{0}', space=sflag, size = 0x4, scoped, tag = 'scoped memory for net_forward.1']
    #allocation6 [shape = 'u8[196608]{0}', space=vmem, size = 0x30000, scoped, tag = 'input window, operand 2, single buffered']
    %9 = vsyncpa [#allocation3], 0
    %10 = vsyncpa [#allocation5], 0
    // Predicated region
    $region2: #{net_forward.1} parent=1 // pred_check
      _
    $region3: #{net_forward.1} parent=1 // pred_check_branch
      %12 = sbr.rel (0) target = $region5
    $region4: #{net_forward.1} parent=1 // pred_region
      %s14 = ssub.s32 4096, 4096
      %15 = vsyncadd [#allocation3], %s14
      %s16 = sshll.u32 [#allocation2], 4
      %s17 = int_to_ptr.vmem [resolvable:$true] %s16
      %22 = dma.hbm_to_vmem [thread:$0]  %s0, 4096, %s17, [#allocation3], 128, 128, 8
    $region5: #{net_forward.1} parent=1 // pred_fallthru
      _
    // Predicated region
    $region6: #{net_forward.1} parent=1 // pred_check
      _
    $region7: #{net_forward.1} parent=1 // pred_check_branch
      %24 = sbr.rel (0) target = $region9
    $region8: #{net_forward.1} parent=1 // pred_region
      %s26 = ssub.s32 2048, 2048
      %27 = vsyncadd [#allocation5], %s26
      %s28 = sshll.u32 [#allocation4], 4
      %s29 = int_to_ptr.vmem [resolvable:$true] %s28
      %34 = dma.hbm_to_vmem [thread:$0]  %s1, 2048, %s29, [#allocation5], 64, 64, 4
    $region9: #{net_forward.1} parent=1 // pred_fallthru
      _
    // Predicated region
    $region10: #{net_forward.1} parent=1 // pred_check
      _
    $region11: #{net_forward.1} parent=1 // pred_check_branch
      %36 = sbr.rel (0) target = $region13
    $region12: #{net_forward.1} parent=1 // pred_region
      %s38 = ssub.s32 6144, 6144
      %39 = vsyncadd [#allocation5], %s38
      %s40 = sshll.u32 [#allocation6], 4
      %s41 = int_to_ptr.vmem [resolvable:$true] %s40
      %46 = dma.hbm_to_vmem [thread:$0]  %s2, 6144, %s41, [#allocation5], 64, 64, 4
    $region13: #{net_forward.1} parent=1 // pred_fallthru
      _
    // Predicated region
    $region14: #{net_forward.1} parent=1 // pred_check
      _
    $region15: #{net_forward.1} parent=1 // pred_check_branch
      %48 = sbr.rel (0) target = $region17
    $region16: #{net_forward.1} parent=1 // pred_region
      _
    $region17: #{net_forward.1} parent=1 // pred_fallthru
      _
    // Predicated region
    $region18: #{net_forward.1} parent=1 // pred_check
      _
    $region19: #{net_forward.1} parent=1 // pred_check_branch
      %50 = sbr.rel (0) target = $region21
    $region20: #{net_forward.1} parent=1 // pred_region
      %51 = dma.done [#allocation3], 4096
    $region21: #{net_forward.1} parent=1 // pred_fallthru
      _
    // Predicated region
    $region22: #{net_forward.1} parent=1 // pred_check
      _
    $region23: #{net_forward.1} parent=1 // pred_check_branch
      %53 = sbr.rel (0) target = $region25
    $region24: #{net_forward.1} parent=1 // pred_region
      %54 = dma.done [#allocation5], 2048
    $region25: #{net_forward.1} parent=1 // pred_fallthru
      _
    // Predicated region
    $region26: #{net_forward.1} parent=1 // pred_check
      _
    $region27: #{net_forward.1} parent=1 // pred_check_branch
      %56 = sbr.rel (0) target = $region29
    $region28: #{net_forward.1} parent=1 // pred_region
      %57 = dma.done [#allocation5], 6144
    $region29: #{net_forward.1} parent=1 // pred_fallthru
      _
    %v59 = vld [vmem:[#allocation4] sm:$0xf]
    %v60 = vld [vmem:[#allocation4 + $0x4] sm:$0xf]
    %v61 = vld [vmem:[#allocation4 + $0x8] sm:$0xf]
    %v62 = vld [vmem:[#allocation4 + $0xc] sm:$0xf]
    %v63 = vld [vmem:[#allocation4 + $0x10] sm:$0xf]
    %v64 = vld [vmem:[#allocation4 + $0x14] sm:$0xf]
    %v65 = vld [vmem:[#allocation4 + $0x18] sm:$0xf]
    %v66 = vld [vmem:[#allocation4 + $0x1c] sm:$0xf]
    %v67 = vld [vmem:[#allocation4 + $0x20] sm:$0xf]
    %v68 = vld [vmem:[#allocation4 + $0x24] sm:$0xf]
    %v69 = vld [vmem:[#allocation4 + $0x28] sm:$0xf]
    %v70 = vld [vmem:[#allocation4 + $0x2c] sm:$0xf]
    %v71 = vld [vmem:[#allocation4 + $0x30] sm:$0xf]
    %v72 = vld [vmem:[#allocation4 + $0x34] sm:$0xf]
    %v73 = vld [vmem:[#allocation4 + $0x38] sm:$0xf]
    %v74 = vld [vmem:[#allocation4 + $0x3c] sm:$0xf]
    %v75 = vld [vmem:[#allocation4 + $0x40] sm:$0xf]
    %v76 = vld [vmem:[#allocation4 + $0x44] sm:$0xf]
    %v77 = vld [vmem:[#allocation4 + $0x48] sm:$0xf]
    %v78 = vld [vmem:[#allocation4 + $0x4c] sm:$0xf]
    %v79 = vld [vmem:[#allocation4 + $0x50] sm:$0xf]
    %v80 = vld [vmem:[#allocation4 + $0x54] sm:$0xf]
    %v81 = vld [vmem:[#allocation4 + $0x58] sm:$0xf]
    %v82 = vld [vmem:[#allocation4 + $0x5c] sm:$0xf]
    %v83 = vld [vmem:[#allocation4 + $0x60] sm:$0xf]
    %v84 = vld [vmem:[#allocation4 + $0x64] sm:$0xf]
    %v85 = vld [vmem:[#allocation4 + $0x68] sm:$0xf]
    %v86 = vld [vmem:[#allocation4 + $0x6c] sm:$0xf]
    %v87 = vld [vmem:[#allocation4 + $0x70] sm:$0xf]
    %v88 = vld [vmem:[#allocation4 + $0x74] sm:$0xf]
    %v89 = vld [vmem:[#allocation4 + $0x78] sm:$0xf]
    %v90 = vld [vmem:[#allocation4 + $0x7c] sm:$0xf]
    %v91 = vld [vmem:[#allocation6] sm:$0xf]
    %v92 = vld [vmem:[#allocation6 + $0x4] sm:$0xf]
    %v93 = vld [vmem:[#allocation6 + $0x8] sm:$0xf]
    %v94 = vld [vmem:[#allocation6 + $0xc] sm:$0xf]
    %v95 = vld [vmem:[#allocation6 + $0x10] sm:$0xf]
    %v96 = vld [vmem:[#allocation6 + $0x14] sm:$0xf]
    %v97 = vld [vmem:[#allocation6 + $0x18] sm:$0xf]
    %v98 = vld [vmem:[#allocation6 + $0x1c] sm:$0xf]
    %v99 = vld [vmem:[#allocation6 + $0x20] sm:$0xf]
    %v100 = vld [vmem:[#allocation6 + $0x24] sm:$0xf]
    %v101 = vld [vmem:[#allocation6 + $0x28] sm:$0xf]
    %v102 = vld [vmem:[#allocation6 + $0x2c] sm:$0xf]
    %v103 = vld [vmem:[#allocation6 + $0x30] sm:$0xf]
    %v104 = vld [vmem:[#allocation6 + $0x34] sm:$0xf]
    %v105 = vld [vmem:[#allocation6 + $0x38] sm:$0xf]
    %v106 = vld [vmem:[#allocation6 + $0x3c] sm:$0xf]
    %v139 = vunpack.c.l.b16 %v59
    %v140 = vunpack.c.l.b16 %v60
    %v141 = vunpack.c.l.b16 %v61
    %v142 = vunpack.c.l.b16 %v62
    %v143 = vunpack.c.l.b16 %v63
    %v144 = vunpack.c.l.b16 %v64
    %v145 = vunpack.c.l.b16 %v65
    %v146 = vunpack.c.l.b16 %v66
    %v147 = vunpack.c.l.b16 %v67
    %v148 = vunpack.c.l.b16 %v68
    %v149 = vunpack.c.l.b16 %v69
    %v150 = vunpack.c.l.b16 %v70
    %v151 = vunpack.c.l.b16 %v71
    %v152 = vunpack.c.l.b16 %v72
    %v153 = vunpack.c.l.b16 %v73
    %v154 = vunpack.c.l.b16 %v74
    %v155 = vunpack.c.l.b16 %v75
    %v156 = vunpack.c.l.b16 %v76
    %v157 = vunpack.c.l.b16 %v77
    %v158 = vunpack.c.l.b16 %v78
    %v159 = vunpack.c.l.b16 %v79
    %v160 = vunpack.c.l.b16 %v80
    %v161 = vunpack.c.l.b16 %v81
    %v162 = vunpack.c.l.b16 %v82
    %v163 = vunpack.c.l.b16 %v83
    %v164 = vunpack.c.l.b16 %v84
    %v165 = vunpack.c.l.b16 %v85
    %v166 = vunpack.c.l.b16 %v86
    %v167 = vunpack.c.l.b16 %v87
    %v168 = vunpack.c.l.b16 %v88
    %v169 = vunpack.c.l.b16 %v89
    %v170 = vunpack.c.l.b16 %v90
    %v171 = vpack.c.b16 %v140, %v139
    %v172 = vpack.c.b16 %v142, %v141
    %v173 = vpack.c.b16 %v144, %v143
    %v174 = vpack.c.b16 %v146, %v145
    %v175 = vpack.c.b16 %v148, %v147
    %v176 = vpack.c.b16 %v150, %v149
    %v177 = vpack.c.b16 %v152, %v151
    %v178 = vpack.c.b16 %v154, %v153
    %v179 = vpack.c.b16 %v156, %v155
    %v180 = vpack.c.b16 %v158, %v157
    %v181 = vpack.c.b16 %v160, %v159
    %v182 = vpack.c.b16 %v162, %v161
    %v183 = vpack.c.b16 %v164, %v163
    %v184 = vpack.c.b16 %v166, %v165
    %v185 = vpack.c.b16 %v168, %v167
    %v186 = vpack.c.b16 %v170, %v169
    %v219 = vunpack.c.l.b16 %v91
    %v220 = vunpack.c.l.b16 %v92
    %v221 = vunpack.c.l.b16 %v93
    %v222 = vunpack.c.l.b16 %v94
    %v223 = vunpack.c.l.b16 %v95
    %v224 = vunpack.c.l.b16 %v96
    %v225 = vunpack.c.l.b16 %v97
    %v226 = vunpack.c.l.b16 %v98
    %v227 = vunpack.c.l.b16 %v99
    %v228 = vunpack.c.l.b16 %v100
    %v229 = vunpack.c.l.b16 %v101
    %v230 = vunpack.c.l.b16 %v102
    %v231 = vunpack.c.l.b16 %v103
    %v232 = vunpack.c.l.b16 %v104
    %v233 = vunpack.c.l.b16 %v105
    %v234 = vunpack.c.l.b16 %v106
    %v235 = vpack.c.b16 %v220, %v219
    %v236 = vpack.c.b16 %v222, %v221
    %v237 = vpack.c.b16 %v224, %v223
    %v238 = vpack.c.b16 %v226, %v225
    %v239 = vpack.c.b16 %v228, %v227
    %v240 = vpack.c.b16 %v230, %v229
    %v241 = vpack.c.b16 %v232, %v231
    %v242 = vpack.c.b16 %v234, %v233
    %251 = vmatprep.subr.bf16.mxu0 0
    %252 = vmatpush1.bf16.msra.mxu0 %v235
    %253 = vmatprep.subr.bf16.mxu0 0
    %254 = vmatpush1.bf16.msra.mxu0 %v236
    %255 = vmatprep.subr.bf16.mxu0 0
    %256 = vmatpush1.bf16.msra.mxu0 %v237
    %257 = vmatprep.subr.bf16.mxu0 0
    %258 = vmatpush1.bf16.msra.mxu0 %v238
    %259 = vmatprep.subr.bf16.mxu0 0
    %260 = vmatpush1.bf16.msra.mxu0 %v239
    %261 = vmatprep.subr.bf16.mxu0 0
    %262 = vmatpush1.bf16.msra.mxu0 %v240
    %263 = vmatprep.subr.bf16.mxu0 0
    %264 = vmatpush1.bf16.msra.mxu0 %v241
    %265 = vmatprep.subr.bf16.mxu0 0
    %266 = vmatpush1.bf16.msra.mxu0 %v242
    %267 = vmatprep.subr.bf16.mxu0 0
    %268 = vmatpush1.bf16.msra.mxu0 0
    %269 = vmatprep.subr.bf16.mxu0 0
    %270 = vmatpush1.bf16.msra.mxu0 0
    %271 = vmatprep.subr.bf16.mxu0 0
    %272 = vmatpush1.bf16.msra.mxu0 0
    %273 = vmatprep.subr.bf16.mxu0 0
    %274 = vmatpush1.bf16.msra.mxu0 0
    %275 = vmatprep.subr.bf16.mxu0 0
    %276 = vmatpush1.bf16.msra.mxu0 0
    %277 = vmatprep.subr.bf16.mxu0 0
    %278 = vmatpush1.bf16.msra.mxu0 0
    %279 = vmatprep.subr.bf16.mxu0 0
    %280 = vmatpush1.bf16.msra.mxu0 0
    %281 = vmatprep.subr.bf16.mxu0 0
    %282 = vmatpush1.bf16.msra.mxu0 0
    %283 = vmatprep.mubr.bf16.mxu0 0
    %284 = vmatmul.mubr.bf16.gmra.mrb[0].mxu0 %v171
    %v285 = vpop.f32.mrb[0].mxu0
    %v286 = vadd.f32 0.0, %v285
    %v287 = vpop.f32.mrb[0].mxu0
    %v288 = vpop.f32.mrb[0].mxu0
    %v289 = vadd.f32 0.0, %v288
    %v290 = vpop.f32.mrb[0].mxu0
    %291 = vmatprep.mubr.bf16.mxu0 0
    %292 = vmatmul.mubr.bf16.gmra.mrb[0].mxu0 %v172
    %v293 = vpop.f32.mrb[0].mxu0
    %v294 = vadd.f32 0.0, %v293
    %v295 = vpop.f32.mrb[0].mxu0
    %v296 = vpop.f32.mrb[0].mxu0
    %v297 = vadd.f32 0.0, %v296
    %v298 = vpop.f32.mrb[0].mxu0
    %299 = vmatprep.mubr.bf16.mxu0 0
    %300 = vmatmul.mubr.bf16.gmra.mrb[0].mxu0 %v173
    %v301 = vpop.f32.mrb[0].mxu0
    %v302 = vadd.f32 0.0, %v301
    %v303 = vpop.f32.mrb[0].mxu0
    %v304 = vpop.f32.mrb[0].mxu0
    %v305 = vadd.f32 0.0, %v304
    %v306 = vpop.f32.mrb[0].mxu0
    %307 = vmatprep.mubr.bf16.mxu0 0
    %308 = vmatmul.mubr.bf16.gmra.mrb[0].mxu0 %v174
    %v309 = vpop.f32.mrb[0].mxu0
    %v310 = vadd.f32 0.0, %v309
    %v311 = vpop.f32.mrb[0].mxu0
    %v312 = vpop.f32.mrb[0].mxu0
    %v313 = vadd.f32 0.0, %v312
    %v314 = vpop.f32.mrb[0].mxu0
    %315 = vmatprep.mubr.bf16.mxu0 0
    %316 = vmatmul.mubr.bf16.gmra.mrb[0].mxu0 %v175
    %v317 = vpop.f32.mrb[0].mxu0
    %v318 = vadd.f32 0.0, %v317
    %v319 = vpop.f32.mrb[0].mxu0
    %v320 = vpop.f32.mrb[0].mxu0
    %v321 = vadd.f32 0.0, %v320
    %v322 = vpop.f32.mrb[0].mxu0
    %323 = vmatprep.mubr.bf16.mxu0 0
    %324 = vmatmul.mubr.bf16.gmra.mrb[0].mxu0 %v176
    %v325 = vpop.f32.mrb[0].mxu0
    %v326 = vadd.f32 0.0, %v325
    %v327 = vpop.f32.mrb[0].mxu0
    %v328 = vpop.f32.mrb[0].mxu0
    %v329 = vadd.f32 0.0, %v328
    %v330 = vpop.f32.mrb[0].mxu0
    %331 = vmatprep.mubr.bf16.mxu0 0
    %332 = vmatmul.mubr.bf16.gmra.mrb[0].mxu0 %v177
    %v333 = vpop.f32.mrb[0].mxu0
    %v334 = vadd.f32 0.0, %v333
    %v335 = vpop.f32.mrb[0].mxu0
    %v336 = vpop.f32.mrb[0].mxu0
    %v337 = vadd.f32 0.0, %v336
    %v338 = vpop.f32.mrb[0].mxu0
    %339 = vmatprep.mubr.bf16.mxu0 0
    %340 = vmatmul.mubr.bf16.gmra.mrb[0].mxu0 %v178
    %v341 = vpop.f32.mrb[0].mxu0
    %v342 = vadd.f32 0.0, %v341
    %v343 = vpop.f32.mrb[0].mxu0
    %v344 = vpop.f32.mrb[0].mxu0
    %v345 = vadd.f32 0.0, %v344
    %v346 = vpop.f32.mrb[0].mxu0
    %347 = vmatprep.mubr.bf16.mxu0 0
    %348 = vmatmul.mubr.bf16.gmra.mrb[0].mxu0 %v179
    %v349 = vpop.f32.mrb[0].mxu0
    %v350 = vadd.f32 0.0, %v349
    %v351 = vpop.f32.mrb[0].mxu0
    %v352 = vpop.f32.mrb[0].mxu0
    %v353 = vadd.f32 0.0, %v352
    %v354 = vpop.f32.mrb[0].mxu0
    %355 = vmatprep.mubr.bf16.mxu0 0
    %356 = vmatmul.mubr.bf16.gmra.mrb[0].mxu0 %v180
    %v357 = vpop.f32.mrb[0].mxu0
    %v358 = vadd.f32 0.0, %v357
    %v359 = vpop.f32.mrb[0].mxu0
    %v360 = vpop.f32.mrb[0].mxu0
    %v361 = vadd.f32 0.0, %v360
    %v362 = vpop.f32.mrb[0].mxu0
    %363 = vmatprep.mubr.bf16.mxu0 0
    %364 = vmatmul.mubr.bf16.gmra.mrb[0].mxu0 %v181
    %v365 = vpop.f32.mrb[0].mxu0
    %v366 = vadd.f32 0.0, %v365
    %v367 = vpop.f32.mrb[0].mxu0
    %v368 = vpop.f32.mrb[0].mxu0
    %v369 = vadd.f32 0.0, %v368
    %v370 = vpop.f32.mrb[0].mxu0
    %371 = vmatprep.mubr.bf16.mxu0 0
    %372 = vmatmul.mubr.bf16.gmra.mrb[0].mxu0 %v182
    %v373 = vpop.f32.mrb[0].mxu0
    %v374 = vadd.f32 0.0, %v373
    %v375 = vpop.f32.mrb[0].mxu0
    %v376 = vpop.f32.mrb[0].mxu0
    %v377 = vadd.f32 0.0, %v376
    %v378 = vpop.f32.mrb[0].mxu0
    %379 = vmatprep.mubr.bf16.mxu0 0
    %380 = vmatmul.mubr.bf16.gmra.mrb[0].mxu0 %v183
    %v381 = vpop.f32.mrb[0].mxu0
    %v382 = vadd.f32 0.0, %v381
    %v383 = vpop.f32.mrb[0].mxu0
    %v384 = vpop.f32.mrb[0].mxu0
    %v385 = vadd.f32 0.0, %v384
    %v386 = vpop.f32.mrb[0].mxu0
    %387 = vmatprep.mubr.bf16.mxu0 0
    %388 = vmatmul.mubr.bf16.gmra.mrb[0].mxu0 %v184
    %v389 = vpop.f32.mrb[0].mxu0
    %v390 = vadd.f32 0.0, %v389
    %v391 = vpop.f32.mrb[0].mxu0
    %v392 = vpop.f32.mrb[0].mxu0
    %v393 = vadd.f32 0.0, %v392
    %v394 = vpop.f32.mrb[0].mxu0
    %395 = vmatprep.mubr.bf16.mxu0 0
    %396 = vmatmul.mubr.bf16.gmra.mrb[0].mxu0 %v185
    %v397 = vpop.f32.mrb[0].mxu0
    %v398 = vadd.f32 0.0, %v397
    %v399 = vpop.f32.mrb[0].mxu0
    %v400 = vpop.f32.mrb[0].mxu0
    %v401 = vadd.f32 0.0, %v400
    %v402 = vpop.f32.mrb[0].mxu0
    %403 = vmatprep.mubr.bf16.mxu0 0
    %404 = vmatmul.mubr.bf16.gmra.mrb[0].mxu0 %v186
    %v405 = vpop.f32.mrb[0].mxu0
    %v406 = vadd.f32 0.0, %v405
    %v407 = vpop.f32.mrb[0].mxu0
    %v408 = vpop.f32.mrb[0].mxu0
    %v409 = vadd.f32 0.0, %v408
    %v410 = vpop.f32.mrb[0].mxu0
    %411 = vdwg.mxu0
    %v412 = vld [vmem:[#allocation2] sm:$0xff]
    %v413 = vld [vmem:[#allocation2 + $0x8] sm:$0xff]
    %v414 = vld [vmem:[#allocation2 + $0x10] sm:$0xff]
    %v415 = vld [vmem:[#allocation2 + $0x18] sm:$0xff]
    %v416 = vld [vmem:[#allocation2 + $0x20] sm:$0xff]
    %v417 = vld [vmem:[#allocation2 + $0x28] sm:$0xff]
    %v418 = vld [vmem:[#allocation2 + $0x30] sm:$0xff]
    %v419 = vld [vmem:[#allocation2 + $0x38] sm:$0xff]
    %v420 = vld [vmem:[#allocation2 + $0x40] sm:$0xff]
    %v421 = vld [vmem:[#allocation2 + $0x48] sm:$0xff]
    %v422 = vld [vmem:[#allocation2 + $0x50] sm:$0xff]
    %v423 = vld [vmem:[#allocation2 + $0x58] sm:$0xff]
    %v424 = vld [vmem:[#allocation2 + $0x60] sm:$0xff]
    %v425 = vld [vmem:[#allocation2 + $0x68] sm:$0xff]
    %v426 = vld [vmem:[#allocation2 + $0x70] sm:$0xff]
    %v427 = vld [vmem:[#allocation2 + $0x78] sm:$0xff]
    %v428 = vld [vmem:[#allocation2 + $0x80] sm:$0xff]
    %v429 = vld [vmem:[#allocation2 + $0x88] sm:$0xff]
    %v430 = vld [vmem:[#allocation2 + $0x90] sm:$0xff]
    %v431 = vld [vmem:[#allocation2 + $0x98] sm:$0xff]
    %v432 = vld [vmem:[#allocation2 + $0xa0] sm:$0xff]
    %v433 = vld [vmem:[#allocation2 + $0xa8] sm:$0xff]
    %v434 = vld [vmem:[#allocation2 + $0xb0] sm:$0xff]
    %v435 = vld [vmem:[#allocation2 + $0xb8] sm:$0xff]
    %v436 = vld [vmem:[#allocation2 + $0xc0] sm:$0xff]
    %v437 = vld [vmem:[#allocation2 + $0xc8] sm:$0xff]
    %v438 = vld [vmem:[#allocation2 + $0xd0] sm:$0xff]
    %v439 = vld [vmem:[#allocation2 + $0xd8] sm:$0xff]
    %v440 = vld [vmem:[#allocation2 + $0xe0] sm:$0xff]
    %v441 = vld [vmem:[#allocation2 + $0xe8] sm:$0xff]
    %v442 = vld [vmem:[#allocation2 + $0xf0] sm:$0xff]
    %v443 = vld [vmem:[#allocation2 + $0xf8] sm:$0xff]
    %v444 = vpack.c.bf16 %v289, %v286
    %v445 = vpack.c.bf16 %v297, %v294
    %v446 = vpack.c.bf16 %v305, %v302
    %v447 = vpack.c.bf16 %v313, %v310
    %v448 = vpack.c.bf16 %v321, %v318
    %v449 = vpack.c.bf16 %v329, %v326
    %v450 = vpack.c.bf16 %v337, %v334
    %v451 = vpack.c.bf16 %v345, %v342
    %v452 = vpack.c.bf16 %v353, %v350
    %v453 = vpack.c.bf16 %v361, %v358
    %v454 = vpack.c.bf16 %v369, %v366
    %v455 = vpack.c.bf16 %v377, %v374
    %v456 = vpack.c.bf16 %v385, %v382
    %v457 = vpack.c.bf16 %v393, %v390
    %v458 = vpack.c.bf16 %v401, %v398
    %v459 = vpack.c.bf16 %v409, %v406
    %v460 = vld [vmem:[%s3] sm:$0x1]
    %v462 = vlaneseq
    %v463 = vshrl.u32 %v462, 7
    %v464 = vsub.s32 0, %v463
    %v465 = vrot.slane %v460, %v464
    %v499 = vunpack.c.l.b16 %v412
    %v500 = vunpack.c.h.b16 %v412
    %v501 = vunpack.c.l.b16 %v413
    %v502 = vunpack.c.h.b16 %v413
    %v503 = vunpack.c.l.b16 %v414
    %v504 = vunpack.c.h.b16 %v414
    %v505 = vunpack.c.l.b16 %v415
    %v506 = vunpack.c.h.b16 %v415
    %v507 = vunpack.c.l.b16 %v416
    %v508 = vunpack.c.h.b16 %v416
    %v509 = vunpack.c.l.b16 %v417
    %v510 = vunpack.c.h.b16 %v417
    %v511 = vunpack.c.l.b16 %v418
    %v512 = vunpack.c.h.b16 %v418
    %v513 = vunpack.c.l.b16 %v419
    %v514 = vunpack.c.h.b16 %v419
    %v515 = vunpack.c.l.b16 %v420
    %v516 = vunpack.c.h.b16 %v420
    %v517 = vunpack.c.l.b16 %v421
    %v518 = vunpack.c.h.b16 %v421
    %v519 = vunpack.c.l.b16 %v422
    %v520 = vunpack.c.h.b16 %v422
    %v521 = vunpack.c.l.b16 %v423
    %v522 = vunpack.c.h.b16 %v423
    %v523 = vunpack.c.l.b16 %v424
    %v524 = vunpack.c.h.b16 %v424
    %v525 = vunpack.c.l.b16 %v425
    %v526 = vunpack.c.h.b16 %v425
    %v527 = vunpack.c.l.b16 %v426
    %v528 = vunpack.c.h.b16 %v426
    %v529 = vunpack.c.l.b16 %v427
    %v530 = vunpack.c.h.b16 %v427
    %v531 = vunpack.c.l.b16 %v428
    %v532 = vunpack.c.h.b16 %v428
    %v533 = vunpack.c.l.b16 %v429
    %v534 = vunpack.c.h.b16 %v429
    %v535 = vunpack.c.l.b16 %v430
    %v536 = vunpack.c.h.b16 %v430
    %v537 = vunpack.c.l.b16 %v431
    %v538 = vunpack.c.h.b16 %v431
    %v539 = vunpack.c.l.b16 %v432
    %v540 = vunpack.c.h.b16 %v432
    %v541 = vunpack.c.l.b16 %v433
    %v542 = vunpack.c.h.b16 %v433
    %v543 = vunpack.c.l.b16 %v434
    %v544 = vunpack.c.h.b16 %v434
    %v545 = vunpack.c.l.b16 %v435
    %v546 = vunpack.c.h.b16 %v435
    %v547 = vunpack.c.l.b16 %v436
    %v548 = vunpack.c.h.b16 %v436
    %v549 = vunpack.c.l.b16 %v437
    %v550 = vunpack.c.h.b16 %v437
    %v551 = vunpack.c.l.b16 %v438
    %v552 = vunpack.c.h.b16 %v438
    %v553 = vunpack.c.l.b16 %v439
    %v554 = vunpack.c.h.b16 %v439
    %v555 = vunpack.c.l.b16 %v440
    %v556 = vunpack.c.h.b16 %v440
    %v557 = vunpack.c.l.b16 %v441
    %v558 = vunpack.c.h.b16 %v441
    %v559 = vunpack.c.l.b16 %v442
    %v560 = vunpack.c.h.b16 %v442
    %v561 = vunpack.c.l.b16 %v443
    %v562 = vunpack.c.h.b16 %v443
    %v563 = vpack.c.b16 %v501, %v499
    %v564 = vpack.c.b16 %v502, %v500
    %v565 = vpack.c.b16 %v505, %v503
    %v566 = vpack.c.b16 %v506, %v504
    %v567 = vpack.c.b16 %v509, %v507
    %v568 = vpack.c.b16 %v510, %v508
    %v569 = vpack.c.b16 %v513, %v511
    %v570 = vpack.c.b16 %v514, %v512
    %v571 = vpack.c.b16 %v517, %v515
    %v572 = vpack.c.b16 %v518, %v516
    %v573 = vpack.c.b16 %v521, %v519
    %v574 = vpack.c.b16 %v522, %v520
    %v575 = vpack.c.b16 %v525, %v523
    %v576 = vpack.c.b16 %v526, %v524
    %v577 = vpack.c.b16 %v529, %v527
    %v578 = vpack.c.b16 %v530, %v528
    %v579 = vpack.c.b16 %v533, %v531
    %v580 = vpack.c.b16 %v534, %v532
    %v581 = vpack.c.b16 %v537, %v535
    %v582 = vpack.c.b16 %v538, %v536
    %v583 = vpack.c.b16 %v541, %v539
    %v584 = vpack.c.b16 %v542, %v540
    %v585 = vpack.c.b16 %v545, %v543
    %v586 = vpack.c.b16 %v546, %v544
    %v587 = vpack.c.b16 %v549, %v547
    %v588 = vpack.c.b16 %v550, %v548
    %v589 = vpack.c.b16 %v553, %v551
    %v590 = vpack.c.b16 %v554, %v552
    %v591 = vpack.c.b16 %v557, %v555
    %v592 = vpack.c.b16 %v558, %v556
    %v593 = vpack.c.b16 %v561, %v559
    %v594 = vpack.c.b16 %v562, %v560
    %627 = vmatprep.subr.bf16.mxu0 0
    %628 = vmatpush1.bf16.msra.mxu0 %v444
    %629 = vmatprep.subr.bf16.mxu0 0
    %630 = vmatpush1.bf16.msra.mxu0 %v445
    %631 = vmatprep.subr.bf16.mxu0 0
    %632 = vmatpush1.bf16.msra.mxu0 %v446
    %633 = vmatprep.subr.bf16.mxu0 0
    %634 = vmatpush1.bf16.msra.mxu0 %v447
    %635 = vmatprep.subr.bf16.mxu0 0
    %636 = vmatpush1.bf16.msra.mxu0 %v448
    %637 = vmatprep.subr.bf16.mxu0 0
    %638 = vmatpush1.bf16.msra.mxu0 %v449
    %639 = vmatprep.subr.bf16.mxu0 0
    %640 = vmatpush1.bf16.msra.mxu0 %v450
    %641 = vmatprep.subr.bf16.mxu0 0
    %642 = vmatpush1.bf16.msra.mxu0 %v451
    %643 = vmatprep.subr.bf16.mxu0 0
    %644 = vmatpush1.bf16.msra.mxu0 %v452
    %645 = vmatprep.subr.bf16.mxu0 0
    %646 = vmatpush1.bf16.msra.mxu0 %v453
    %647 = vmatprep.subr.bf16.mxu0 0
    %648 = vmatpush1.bf16.msra.mxu0 %v454
    %649 = vmatprep.subr.bf16.mxu0 0
    %650 = vmatpush1.bf16.msra.mxu0 %v455
    %651 = vmatprep.subr.bf16.mxu0 0
    %652 = vmatpush1.bf16.msra.mxu0 %v456
    %653 = vmatprep.subr.bf16.mxu0 0
    %654 = vmatpush1.bf16.msra.mxu0 %v457
    %655 = vmatprep.subr.bf16.mxu0 0
    %656 = vmatpush1.bf16.msra.mxu0 %v458
    %657 = vmatprep.subr.bf16.mxu0 0
    %658 = vmatpush1.bf16.msra.mxu0 %v459
    %659 = vmatprep.mubr.bf16.mxu0 %v564
    %660 = vmatmul.mubr.bf16.gmra.mrb[0].mxu0 %v563
    %v661 = vpop.f32.mrb[0].mxu0
    %v662 = vadd.f32 %v465, %v661
    %v663 = vpop.f32.mrb[0].mxu0
    %v664 = vpop.f32.mrb[0].mxu0
    %v665 = vadd.f32 %v465, %v664
    %v666 = vpop.f32.mrb[0].mxu0
    %667 = vmatprep.mubr.bf16.mxu0 %v566
    %668 = vmatmul.mubr.bf16.gmra.mrb[0].mxu0 %v565
    %v669 = vpop.f32.mrb[0].mxu0
    %v670 = vadd.f32 %v465, %v669
    %v671 = vpop.f32.mrb[0].mxu0
    %v672 = vpop.f32.mrb[0].mxu0
    %v673 = vadd.f32 %v465, %v672
    %v674 = vpop.f32.mrb[0].mxu0
    %675 = vmatprep.mubr.bf16.mxu0 %v568
    %676 = vmatmul.mubr.bf16.gmra.mrb[0].mxu0 %v567
    %v677 = vpop.f32.mrb[0].mxu0
    %v678 = vadd.f32 %v465, %v677
    %v679 = vpop.f32.mrb[0].mxu0
    %v680 = vpop.f32.mrb[0].mxu0
    %v681 = vadd.f32 %v465, %v680
    %v682 = vpop.f32.mrb[0].mxu0
    %683 = vmatprep.mubr.bf16.mxu0 %v570
    %684 = vmatmul.mubr.bf16.gmra.mrb[0].mxu0 %v569
    %v685 = vpop.f32.mrb[0].mxu0
    %v686 = vadd.f32 %v465, %v685
    %v687 = vpop.f32.mrb[0].mxu0
    %v688 = vpop.f32.mrb[0].mxu0
    %v689 = vadd.f32 %v465, %v688
    %v690 = vpop.f32.mrb[0].mxu0
    %691 = vmatprep.mubr.bf16.mxu0 %v572
    %692 = vmatmul.mubr.bf16.gmra.mrb[0].mxu0 %v571
    %v693 = vpop.f32.mrb[0].mxu0
    %v694 = vadd.f32 %v465, %v693
    %v695 = vpop.f32.mrb[0].mxu0
    %v696 = vpop.f32.mrb[0].mxu0
    %v697 = vadd.f32 %v465, %v696
    %v698 = vpop.f32.mrb[0].mxu0
    %699 = vmatprep.mubr.bf16.mxu0 %v574
    %700 = vmatmul.mubr.bf16.gmra.mrb[0].mxu0 %v573
    %v701 = vpop.f32.mrb[0].mxu0
    %v702 = vadd.f32 %v465, %v701
    %v703 = vpop.f32.mrb[0].mxu0
    %v704 = vpop.f32.mrb[0].mxu0
    %v705 = vadd.f32 %v465, %v704
    %v706 = vpop.f32.mrb[0].mxu0
    %707 = vmatprep.mubr.bf16.mxu0 %v576
    %708 = vmatmul.mubr.bf16.gmra.mrb[0].mxu0 %v575
    %v709 = vpop.f32.mrb[0].mxu0
    %v710 = vadd.f32 %v465, %v709
    %v711 = vpop.f32.mrb[0].mxu0
    %v712 = vpop.f32.mrb[0].mxu0
    %v713 = vadd.f32 %v465, %v712
    %v714 = vpop.f32.mrb[0].mxu0
    %715 = vmatprep.mubr.bf16.mxu0 %v578
    %716 = vmatmul.mubr.bf16.gmra.mrb[0].mxu0 %v577
    %v717 = vpop.f32.mrb[0].mxu0
    %v718 = vadd.f32 %v465, %v717
    %v719 = vpop.f32.mrb[0].mxu0
    %v720 = vpop.f32.mrb[0].mxu0
    %v721 = vadd.f32 %v465, %v720
    %v722 = vpop.f32.mrb[0].mxu0
    %723 = vmatprep.mubr.bf16.mxu0 %v580
    %724 = vmatmul.mubr.bf16.gmra.mrb[0].mxu0 %v579
    %v725 = vpop.f32.mrb[0].mxu0
    %v726 = vadd.f32 %v465, %v725
    %v727 = vpop.f32.mrb[0].mxu0
    %v728 = vpop.f32.mrb[0].mxu0
    %v729 = vadd.f32 %v465, %v728
    %v730 = vpop.f32.mrb[0].mxu0
    %731 = vmatprep.mubr.bf16.mxu0 %v582
    %732 = vmatmul.mubr.bf16.gmra.mrb[0].mxu0 %v581
    %v733 = vpop.f32.mrb[0].mxu0
    %v734 = vadd.f32 %v465, %v733
    %v735 = vpop.f32.mrb[0].mxu0
    %v736 = vpop.f32.mrb[0].mxu0
    %v737 = vadd.f32 %v465, %v736
    %v738 = vpop.f32.mrb[0].mxu0
    %739 = vmatprep.mubr.bf16.mxu0 %v584
    %740 = vmatmul.mubr.bf16.gmra.mrb[0].mxu0 %v583
    %v741 = vpop.f32.mrb[0].mxu0
    %v742 = vadd.f32 %v465, %v741
    %v743 = vpop.f32.mrb[0].mxu0
    %v744 = vpop.f32.mrb[0].mxu0
    %v745 = vadd.f32 %v465, %v744
    %v746 = vpop.f32.mrb[0].mxu0
    %747 = vmatprep.mubr.bf16.mxu0 %v586
    %748 = vmatmul.mubr.bf16.gmra.mrb[0].mxu0 %v585
    %v749 = vpop.f32.mrb[0].mxu0
    %v750 = vadd.f32 %v465, %v749
    %v751 = vpop.f32.mrb[0].mxu0
    %v752 = vpop.f32.mrb[0].mxu0
    %v753 = vadd.f32 %v465, %v752
    %v754 = vpop.f32.mrb[0].mxu0
    %755 = vmatprep.mubr.bf16.mxu0 %v588
    %756 = vmatmul.mubr.bf16.gmra.mrb[0].mxu0 %v587
    %v757 = vpop.f32.mrb[0].mxu0
    %v758 = vadd.f32 %v465, %v757
    %v759 = vpop.f32.mrb[0].mxu0
    %v760 = vpop.f32.mrb[0].mxu0
    %v761 = vadd.f32 %v465, %v760
    %v762 = vpop.f32.mrb[0].mxu0
    %763 = vmatprep.mubr.bf16.mxu0 %v590
    %764 = vmatmul.mubr.bf16.gmra.mrb[0].mxu0 %v589
    %v765 = vpop.f32.mrb[0].mxu0
    %v766 = vadd.f32 %v465, %v765
    %v767 = vpop.f32.mrb[0].mxu0
    %v768 = vpop.f32.mrb[0].mxu0
    %v769 = vadd.f32 %v465, %v768
    %v770 = vpop.f32.mrb[0].mxu0
    %771 = vmatprep.mubr.bf16.mxu0 %v592
    %772 = vmatmul.mubr.bf16.gmra.mrb[0].mxu0 %v591
    %v773 = vpop.f32.mrb[0].mxu0
    %v774 = vadd.f32 %v465, %v773
    %v775 = vpop.f32.mrb[0].mxu0
    %v776 = vpop.f32.mrb[0].mxu0
    %v777 = vadd.f32 %v465, %v776
    %v778 = vpop.f32.mrb[0].mxu0
    %779 = vmatprep.mubr.bf16.mxu0 %v594
    %780 = vmatmul.mubr.bf16.gmra.mrb[0].mxu0 %v593
    %v781 = vpop.f32.mrb[0].mxu0
    %v782 = vadd.f32 %v465, %v781
    %v783 = vpop.f32.mrb[0].mxu0
    %v784 = vpop.f32.mrb[0].mxu0
    %v785 = vadd.f32 %v465, %v784
    %v786 = vpop.f32.mrb[0].mxu0
    %787 = vdwg.mxu0
    %v788 = vmax.f32 %v662, 0.0
    %v789 = vmax.f32 %v665, 0.0
    %v790 = vmax.f32 %v670, 0.0
    %v791 = vmax.f32 %v673, 0.0
    %v792 = vmax.f32 %v678, 0.0
    %v793 = vmax.f32 %v681, 0.0
    %v794 = vmax.f32 %v686, 0.0
    %v795 = vmax.f32 %v689, 0.0
    %v796 = vmax.f32 %v694, 0.0
    %v797 = vmax.f32 %v697, 0.0
    %v798 = vmax.f32 %v702, 0.0
    %v799 = vmax.f32 %v705, 0.0
    %v800 = vmax.f32 %v710, 0.0
    %v801 = vmax.f32 %v713, 0.0
    %v802 = vmax.f32 %v718, 0.0
    %v803 = vmax.f32 %v721, 0.0
    %v804 = vmax.f32 %v726, 0.0
    %v805 = vmax.f32 %v729, 0.0
    %v806 = vmax.f32 %v734, 0.0
    %v807 = vmax.f32 %v737, 0.0
    %v808 = vmax.f32 %v742, 0.0
    %v809 = vmax.f32 %v745, 0.0
    %v810 = vmax.f32 %v750, 0.0
    %v811 = vmax.f32 %v753, 0.0
    %v812 = vmax.f32 %v758, 0.0
    %v813 = vmax.f32 %v761, 0.0
    %v814 = vmax.f32 %v766, 0.0
    %v815 = vmax.f32 %v769, 0.0
    %v816 = vmax.f32 %v774, 0.0
    %v817 = vmax.f32 %v777, 0.0
    %v818 = vmax.f32 %v782, 0.0
    %v819 = vmax.f32 %v785, 0.0
    %v820 = vpack.c.bf16 %v789, %v788
    %v821 = vpack.c.bf16 %v791, %v790
    %v822 = vpack.c.bf16 %v793, %v792
    %v823 = vpack.c.bf16 %v795, %v794
    %v824 = vpack.c.bf16 %v797, %v796
    %v825 = vpack.c.bf16 %v799, %v798
    %v826 = vpack.c.bf16 %v801, %v800
    %v827 = vpack.c.bf16 %v803, %v802
    %v828 = vpack.c.bf16 %v805, %v804
    %v829 = vpack.c.bf16 %v807, %v806
    %v830 = vpack.c.bf16 %v809, %v808
    %v831 = vpack.c.bf16 %v811, %v810
    %v832 = vpack.c.bf16 %v813, %v812
    %v833 = vpack.c.bf16 %v815, %v814
    %v834 = vpack.c.bf16 %v817, %v816
    %v835 = vpack.c.bf16 %v819, %v818
    %s836 = scalar_lea.vmem [#allocation6], 64
    %v837 = vld [vmem:[%s836] sm:$0xf]
    %v838 = vld [vmem:[%s836 + $0x4] sm:$0xf]
    %v839 = vld [vmem:[%s836 + $0x8] sm:$0xf]
    %v840 = vld [vmem:[%s836 + $0xc] sm:$0xf]
    %v841 = vld [vmem:[%s836 + $0x10] sm:$0xf]
    %v842 = vld [vmem:[%s836 + $0x14] sm:$0xf]
    %v843 = vld [vmem:[%s836 + $0x18] sm:$0xf]
    %v844 = vld [vmem:[%s836 + $0x1c] sm:$0xf]
    %v845 = vld [vmem:[%s836 + $0x20] sm:$0xf]
    %v846 = vld [vmem:[%s836 + $0x24] sm:$0xf]
    %v847 = vld [vmem:[%s836 + $0x28] sm:$0xf]
    %v848 = vld [vmem:[%s836 + $0x2c] sm:$0xf]
    %v849 = vld [vmem:[%s836 + $0x30] sm:$0xf]
    %v850 = vld [vmem:[%s836 + $0x34] sm:$0xf]
    %v851 = vld [vmem:[%s836 + $0x38] sm:$0xf]
    %v852 = vld [vmem:[%s836 + $0x3c] sm:$0xf]
    %v869 = vunpack.c.l.b16 %v837
    %v870 = vunpack.c.l.b16 %v838
    %v871 = vunpack.c.l.b16 %v839
    %v872 = vunpack.c.l.b16 %v840
    %v873 = vunpack.c.l.b16 %v841
    %v874 = vunpack.c.l.b16 %v842
    %v875 = vunpack.c.l.b16 %v843
    %v876 = vunpack.c.l.b16 %v844
    %v877 = vunpack.c.l.b16 %v845
    %v878 = vunpack.c.l.b16 %v846
    %v879 = vunpack.c.l.b16 %v847
    %v880 = vunpack.c.l.b16 %v848
    %v881 = vunpack.c.l.b16 %v849
    %v882 = vunpack.c.l.b16 %v850
    %v883 = vunpack.c.l.b16 %v851
    %v884 = vunpack.c.l.b16 %v852
    %v885 = vpack.c.b16 %v870, %v869
    %v886 = vpack.c.b16 %v872, %v871
    %v887 = vpack.c.b16 %v874, %v873
    %v888 = vpack.c.b16 %v876, %v875
    %v889 = vpack.c.b16 %v878, %v877
    %v890 = vpack.c.b16 %v880, %v879
    %v891 = vpack.c.b16 %v882, %v881
    %v892 = vpack.c.b16 %v884, %v883
    %901 = vmatprep.subr.bf16.mxu0 0
    %902 = vmatpush1.bf16.msra.mxu0 %v885
    %903 = vmatprep.subr.bf16.mxu0 0
    %904 = vmatpush1.bf16.msra.mxu0 %v886
    %905 = vmatprep.subr.bf16.mxu0 0
    %906 = vmatpush1.bf16.msra.mxu0 %v887
    %907 = vmatprep.subr.bf16.mxu0 0
    %908 = vmatpush1.bf16.msra.mxu0 %v888
    %909 = vmatprep.subr.bf16.mxu0 0
    %910 = vmatpush1.bf16.msra.mxu0 %v889
    %911 = vmatprep.subr.bf16.mxu0 0
    %912 = vmatpush1.bf16.msra.mxu0 %v890
    %913 = vmatprep.subr.bf16.mxu0 0
    %914 = vmatpush1.bf16.msra.mxu0 %v891
    %915 = vmatprep.subr.bf16.mxu0 0
    %916 = vmatpush1.bf16.msra.mxu0 %v892
    %917 = vmatprep.subr.bf16.mxu0 0
    %918 = vmatpush1.bf16.msra.mxu0 0
    %919 = vmatprep.subr.bf16.mxu0 0
    %920 = vmatpush1.bf16.msra.mxu0 0
    %921 = vmatprep.subr.bf16.mxu0 0
    %922 = vmatpush1.bf16.msra.mxu0 0
    %923 = vmatprep.subr.bf16.mxu0 0
    %924 = vmatpush1.bf16.msra.mxu0 0
    %925 = vmatprep.subr.bf16.mxu0 0
    %926 = vmatpush1.bf16.msra.mxu0 0
    %927 = vmatprep.subr.bf16.mxu0 0
    %928 = vmatpush1.bf16.msra.mxu0 0
    %929 = vmatprep.subr.bf16.mxu0 0
    %930 = vmatpush1.bf16.msra.mxu0 0
    %931 = vmatprep.subr.bf16.mxu0 0
    %932 = vmatpush1.bf16.msra.mxu0 0
    %933 = vmatprep.mubr.bf16.mxu0 0
    %934 = vmatmul.mubr.bf16.gmra.mrb[0].mxu0 %v820
    %v935 = vpop.f32.mrb[0].mxu0
    %v936 = vadd.f32 0.0, %v935
    %v937 = vpop.f32.mrb[0].mxu0
    %v938 = vpop.f32.mrb[0].mxu0
    %v939 = vadd.f32 0.0, %v938
    %v940 = vpop.f32.mrb[0].mxu0
    %941 = vmatprep.mubr.bf16.mxu0 0
    %942 = vmatmul.mubr.bf16.gmra.mrb[0].mxu0 %v821
    %v943 = vpop.f32.mrb[0].mxu0
    %v944 = vadd.f32 0.0, %v943
    %v945 = vpop.f32.mrb[0].mxu0
    %v946 = vpop.f32.mrb[0].mxu0
    %v947 = vadd.f32 0.0, %v946
    %v948 = vpop.f32.mrb[0].mxu0
    %949 = vmatprep.mubr.bf16.mxu0 0
    %950 = vmatmul.mubr.bf16.gmra.mrb[0].mxu0 %v822
    %v951 = vpop.f32.mrb[0].mxu0
    %v952 = vadd.f32 0.0, %v951
    %v953 = vpop.f32.mrb[0].mxu0
    %v954 = vpop.f32.mrb[0].mxu0
    %v955 = vadd.f32 0.0, %v954
    %v956 = vpop.f32.mrb[0].mxu0
    %957 = vmatprep.mubr.bf16.mxu0 0
    %958 = vmatmul.mubr.bf16.gmra.mrb[0].mxu0 %v823
    %v959 = vpop.f32.mrb[0].mxu0
    %v960 = vadd.f32 0.0, %v959
    %v961 = vpop.f32.mrb[0].mxu0
    %v962 = vpop.f32.mrb[0].mxu0
    %v963 = vadd.f32 0.0, %v962
    %v964 = vpop.f32.mrb[0].mxu0
    %965 = vmatprep.mubr.bf16.mxu0 0
    %966 = vmatmul.mubr.bf16.gmra.mrb[0].mxu0 %v824
    %v967 = vpop.f32.mrb[0].mxu0
    %v968 = vadd.f32 0.0, %v967
    %v969 = vpop.f32.mrb[0].mxu0
    %v970 = vpop.f32.mrb[0].mxu0
    %v971 = vadd.f32 0.0, %v970
    %v972 = vpop.f32.mrb[0].mxu0
    %973 = vmatprep.mubr.bf16.mxu0 0
    %974 = vmatmul.mubr.bf16.gmra.mrb[0].mxu0 %v825
    %v975 = vpop.f32.mrb[0].mxu0
    %v976 = vadd.f32 0.0, %v975
    %v977 = vpop.f32.mrb[0].mxu0
    %v978 = vpop.f32.mrb[0].mxu0
    %v979 = vadd.f32 0.0, %v978
    %v980 = vpop.f32.mrb[0].mxu0
    %981 = vmatprep.mubr.bf16.mxu0 0
    %982 = vmatmul.mubr.bf16.gmra.mrb[0].mxu0 %v826
    %v983 = vpop.f32.mrb[0].mxu0
    %v984 = vadd.f32 0.0, %v983
    %v985 = vpop.f32.mrb[0].mxu0
    %v986 = vpop.f32.mrb[0].mxu0
    %v987 = vadd.f32 0.0, %v986
    %v988 = vpop.f32.mrb[0].mxu0
    %989 = vmatprep.mubr.bf16.mxu0 0
    %990 = vmatmul.mubr.bf16.gmra.mrb[0].mxu0 %v827
    %v991 = vpop.f32.mrb[0].mxu0
    %v992 = vadd.f32 0.0, %v991
    %v993 = vpop.f32.mrb[0].mxu0
    %v994 = vpop.f32.mrb[0].mxu0
    %v995 = vadd.f32 0.0, %v994
    %v996 = vpop.f32.mrb[0].mxu0
    %997 = vmatprep.mubr.bf16.mxu0 0
    %998 = vmatmul.mubr.bf16.gmra.mrb[0].mxu0 %v828
    %v999 = vpop.f32.mrb[0].mxu0
    %v1000 = vadd.f32 0.0, %v999
    %v1001 = vpop.f32.mrb[0].mxu0
    %v1002 = vpop.f32.mrb[0].mxu0
    %v1003 = vadd.f32 0.0, %v1002
    %v1004 = vpop.f32.mrb[0].mxu0
    %1005 = vmatprep.mubr.bf16.mxu0 0
    %1006 = vmatmul.mubr.bf16.gmra.mrb[0].mxu0 %v829
    %v1007 = vpop.f32.mrb[0].mxu0
    %v1008 = vadd.f32 0.0, %v1007
    %v1009 = vpop.f32.mrb[0].mxu0
    %v1010 = vpop.f32.mrb[0].mxu0
    %v1011 = vadd.f32 0.0, %v1010
    %v1012 = vpop.f32.mrb[0].mxu0
    %1013 = vmatprep.mubr.bf16.mxu0 0
    %1014 = vmatmul.mubr.bf16.gmra.mrb[0].mxu0 %v830
    %v1015 = vpop.f32.mrb[0].mxu0
    %v1016 = vadd.f32 0.0, %v1015
    %v1017 = vpop.f32.mrb[0].mxu0
    %v1018 = vpop.f32.mrb[0].mxu0
    %v1019 = vadd.f32 0.0, %v1018
    %v1020 = vpop.f32.mrb[0].mxu0
    %1021 = vmatprep.mubr.bf16.mxu0 0
    %1022 = vmatmul.mubr.bf16.gmra.mrb[0].mxu0 %v831
    %v1023 = vpop.f32.mrb[0].mxu0
    %v1024 = vadd.f32 0.0, %v1023
    %v1025 = vpop.f32.mrb[0].mxu0
    %v1026 = vpop.f32.mrb[0].mxu0
    %v1027 = vadd.f32 0.0, %v1026
    %v1028 = vpop.f32.mrb[0].mxu0
    %1029 = vmatprep.mubr.bf16.mxu0 0
    %1030 = vmatmul.mubr.bf16.gmra.mrb[0].mxu0 %v832
    %v1031 = vpop.f32.mrb[0].mxu0
    %v1032 = vadd.f32 0.0, %v1031
    %v1033 = vpop.f32.mrb[0].mxu0
    %v1034 = vpop.f32.mrb[0].mxu0
    %v1035 = vadd.f32 0.0, %v1034
    %v1036 = vpop.f32.mrb[0].mxu0
    %1037 = vmatprep.mubr.bf16.mxu0 0
    %1038 = vmatmul.mubr.bf16.gmra.mrb[0].mxu0 %v833
    %v1039 = vpop.f32.mrb[0].mxu0
    %v1040 = vadd.f32 0.0, %v1039
    %v1041 = vpop.f32.mrb[0].mxu0
    %v1042 = vpop.f32.mrb[0].mxu0
    %v1043 = vadd.f32 0.0, %v1042
    %v1044 = vpop.f32.mrb[0].mxu0
    %1045 = vmatprep.mubr.bf16.mxu0 0
    %1046 = vmatmul.mubr.bf16.gmra.mrb[0].mxu0 %v834
    %v1047 = vpop.f32.mrb[0].mxu0
    %v1048 = vadd.f32 0.0, %v1047
    %v1049 = vpop.f32.mrb[0].mxu0
    %v1050 = vpop.f32.mrb[0].mxu0
    %v1051 = vadd.f32 0.0, %v1050
    %v1052 = vpop.f32.mrb[0].mxu0
    %1053 = vmatprep.mubr.bf16.mxu0 0
    %1054 = vmatmul.mubr.bf16.gmra.mrb[0].mxu0 %v835
    %v1055 = vpop.f32.mrb[0].mxu0
    %v1056 = vadd.f32 0.0, %v1055
    %v1057 = vpop.f32.mrb[0].mxu0
    %v1058 = vpop.f32.mrb[0].mxu0
    %v1059 = vadd.f32 0.0, %v1058
    %v1060 = vpop.f32.mrb[0].mxu0
    %1061 = vdwg.mxu0
    %v1062 = vpack.c.bf16 %v939, %v936
    %v1063 = vpack.c.bf16 %v947, %v944
    %v1064 = vpack.c.bf16 %v955, %v952
    %v1065 = vpack.c.bf16 %v963, %v960
    %v1066 = vpack.c.bf16 %v971, %v968
    %v1067 = vpack.c.bf16 %v979, %v976
    %v1068 = vpack.c.bf16 %v987, %v984
    %v1069 = vpack.c.bf16 %v995, %v992
    %v1070 = vpack.c.bf16 %v1003, %v1000
    %v1071 = vpack.c.bf16 %v1011, %v1008
    %v1072 = vpack.c.bf16 %v1019, %v1016
    %v1073 = vpack.c.bf16 %v1027, %v1024
    %v1074 = vpack.c.bf16 %v1035, %v1032
    %v1075 = vpack.c.bf16 %v1043, %v1040
    %v1076 = vpack.c.bf16 %v1051, %v1048
    %v1077 = vpack.c.bf16 %v1059, %v1056
    %s1078 = scalar_lea.vmem %s3, 1
    %v1079 = vld [vmem:[%s1078] sm:$0x1]
    %v1081 = vlaneseq
    %v1082 = vshrl.u32 %v1081, 7
    %v1083 = vsub.s32 0, %v1082
    %v1084 = vrot.slane %v1079, %v1083
    %1086 = vmatprep.subr.bf16.mxu0 0
    %1087 = vmatpush1.bf16.msra.mxu0 %v1062
    %1088 = vmatprep.subr.bf16.mxu0 0
    %1089 = vmatpush1.bf16.msra.mxu0 %v1063
    %1090 = vmatprep.subr.bf16.mxu0 0
    %1091 = vmatpush1.bf16.msra.mxu0 %v1064
    %1092 = vmatprep.subr.bf16.mxu0 0
    %1093 = vmatpush1.bf16.msra.mxu0 %v1065
    %1094 = vmatprep.subr.bf16.mxu0 0
    %1095 = vmatpush1.bf16.msra.mxu0 %v1066
    %1096 = vmatprep.subr.bf16.mxu0 0
    %1097 = vmatpush1.bf16.msra.mxu0 %v1067
    %1098 = vmatprep.subr.bf16.mxu0 0
    %1099 = vmatpush1.bf16.msra.mxu0 %v1068
    %1100 = vmatprep.subr.bf16.mxu0 0
    %1101 = vmatpush1.bf16.msra.mxu0 %v1069
    %1102 = vmatprep.subr.bf16.mxu0 0
    %1103 = vmatpush1.bf16.msra.mxu0 %v1070
    %1104 = vmatprep.subr.bf16.mxu0 0
    %1105 = vmatpush1.bf16.msra.mxu0 %v1071
    %1106 = vmatprep.subr.bf16.mxu0 0
    %1107 = vmatpush1.bf16.msra.mxu0 %v1072
    %1108 = vmatprep.subr.bf16.mxu0 0
    %1109 = vmatpush1.bf16.msra.mxu0 %v1073
    %1110 = vmatprep.subr.bf16.mxu0 0
    %1111 = vmatpush1.bf16.msra.mxu0 %v1074
    %1112 = vmatprep.subr.bf16.mxu0 0
    %1113 = vmatpush1.bf16.msra.mxu0 %v1075
    %1114 = vmatprep.subr.bf16.mxu0 0
    %1115 = vmatpush1.bf16.msra.mxu0 %v1076
    %1116 = vmatprep.subr.bf16.mxu0 0
    %1117 = vmatpush1.bf16.msra.mxu0 %v1077
    %1118 = vmatprep.mubr.bf16.mxu0 %v564
    %1119 = vmatmul.mubr.bf16.gmra.mrb[0].mxu0 %v563
    %v1120 = vpop.f32.mrb[0].mxu0
    %v1121 = vadd.f32 %v1084, %v1120
    %v1122 = vpop.f32.mrb[0].mxu0
    %v1123 = vpop.f32.mrb[0].mxu0
    %v1124 = vadd.f32 %v1084, %v1123
    %v1125 = vpop.f32.mrb[0].mxu0
    %1126 = vmatprep.mubr.bf16.mxu0 %v566
    %1127 = vmatmul.mubr.bf16.gmra.mrb[0].mxu0 %v565
    %v1128 = vpop.f32.mrb[0].mxu0
    %v1129 = vadd.f32 %v1084, %v1128
    %v1130 = vpop.f32.mrb[0].mxu0
    %v1131 = vpop.f32.mrb[0].mxu0
    %v1132 = vadd.f32 %v1084, %v1131
    %v1133 = vpop.f32.mrb[0].mxu0
    %1134 = vmatprep.mubr.bf16.mxu0 %v568
    %1135 = vmatmul.mubr.bf16.gmra.mrb[0].mxu0 %v567
    %v1136 = vpop.f32.mrb[0].mxu0
    %v1137 = vadd.f32 %v1084, %v1136
    %v1138 = vpop.f32.mrb[0].mxu0
    %v1139 = vpop.f32.mrb[0].mxu0
    %v1140 = vadd.f32 %v1084, %v1139
    %v1141 = vpop.f32.mrb[0].mxu0
    %1142 = vmatprep.mubr.bf16.mxu0 %v570
    %1143 = vmatmul.mubr.bf16.gmra.mrb[0].mxu0 %v569
    %v1144 = vpop.f32.mrb[0].mxu0
    %v1145 = vadd.f32 %v1084, %v1144
    %v1146 = vpop.f32.mrb[0].mxu0
    %v1147 = vpop.f32.mrb[0].mxu0
    %v1148 = vadd.f32 %v1084, %v1147
    %v1149 = vpop.f32.mrb[0].mxu0
    %1150 = vmatprep.mubr.bf16.mxu0 %v572
    %1151 = vmatmul.mubr.bf16.gmra.mrb[0].mxu0 %v571
    %v1152 = vpop.f32.mrb[0].mxu0
    %v1153 = vadd.f32 %v1084, %v1152
    %v1154 = vpop.f32.mrb[0].mxu0
    %v1155 = vpop.f32.mrb[0].mxu0
    %v1156 = vadd.f32 %v1084, %v1155
    %v1157 = vpop.f32.mrb[0].mxu0
    %1158 = vmatprep.mubr.bf16.mxu0 %v574
    %1159 = vmatmul.mubr.bf16.gmra.mrb[0].mxu0 %v573
    %v1160 = vpop.f32.mrb[0].mxu0
    %v1161 = vadd.f32 %v1084, %v1160
    %v1162 = vpop.f32.mrb[0].mxu0
    %v1163 = vpop.f32.mrb[0].mxu0
    %v1164 = vadd.f32 %v1084, %v1163
    %v1165 = vpop.f32.mrb[0].mxu0
    %1166 = vmatprep.mubr.bf16.mxu0 %v576
    %1167 = vmatmul.mubr.bf16.gmra.mrb[0].mxu0 %v575
    %v1168 = vpop.f32.mrb[0].mxu0
    %v1169 = vadd.f32 %v1084, %v1168
    %v1170 = vpop.f32.mrb[0].mxu0
    %v1171 = vpop.f32.mrb[0].mxu0
    %v1172 = vadd.f32 %v1084, %v1171
    %v1173 = vpop.f32.mrb[0].mxu0
    %1174 = vmatprep.mubr.bf16.mxu0 %v578
    %1175 = vmatmul.mubr.bf16.gmra.mrb[0].mxu0 %v577
    %v1176 = vpop.f32.mrb[0].mxu0
    %v1177 = vadd.f32 %v1084, %v1176
    %v1178 = vpop.f32.mrb[0].mxu0
    %v1179 = vpop.f32.mrb[0].mxu0
    %v1180 = vadd.f32 %v1084, %v1179
    %v1181 = vpop.f32.mrb[0].mxu0
    %1182 = vmatprep.mubr.bf16.mxu0 %v580
    %1183 = vmatmul.mubr.bf16.gmra.mrb[0].mxu0 %v579
    %v1184 = vpop.f32.mrb[0].mxu0
    %v1185 = vadd.f32 %v1084, %v1184
    %v1186 = vpop.f32.mrb[0].mxu0
    %v1187 = vpop.f32.mrb[0].mxu0
    %v1188 = vadd.f32 %v1084, %v1187
    %v1189 = vpop.f32.mrb[0].mxu0
    %1190 = vmatprep.mubr.bf16.mxu0 %v582
    %1191 = vmatmul.mubr.bf16.gmra.mrb[0].mxu0 %v581
    %v1192 = vpop.f32.mrb[0].mxu0
    %v1193 = vadd.f32 %v1084, %v1192
    %v1194 = vpop.f32.mrb[0].mxu0
    %v1195 = vpop.f32.mrb[0].mxu0
    %v1196 = vadd.f32 %v1084, %v1195
    %v1197 = vpop.f32.mrb[0].mxu0
    %1198 = vmatprep.mubr.bf16.mxu0 %v584
    %1199 = vmatmul.mubr.bf16.gmra.mrb[0].mxu0 %v583
    %v1200 = vpop.f32.mrb[0].mxu0
    %v1201 = vadd.f32 %v1084, %v1200
    %v1202 = vpop.f32.mrb[0].mxu0
    %v1203 = vpop.f32.mrb[0].mxu0
    %v1204 = vadd.f32 %v1084, %v1203
    %v1205 = vpop.f32.mrb[0].mxu0
    %1206 = vmatprep.mubr.bf16.mxu0 %v586
    %1207 = vmatmul.mubr.bf16.gmra.mrb[0].mxu0 %v585
    %v1208 = vpop.f32.mrb[0].mxu0
    %v1209 = vadd.f32 %v1084, %v1208
    %v1210 = vpop.f32.mrb[0].mxu0
    %v1211 = vpop.f32.mrb[0].mxu0
    %v1212 = vadd.f32 %v1084, %v1211
    %v1213 = vpop.f32.mrb[0].mxu0
    %1214 = vmatprep.mubr.bf16.mxu0 %v588
    %1215 = vmatmul.mubr.bf16.gmra.mrb[0].mxu0 %v587
    %v1216 = vpop.f32.mrb[0].mxu0
    %v1217 = vadd.f32 %v1084, %v1216
    %v1218 = vpop.f32.mrb[0].mxu0
    %v1219 = vpop.f32.mrb[0].mxu0
    %v1220 = vadd.f32 %v1084, %v1219
    %v1221 = vpop.f32.mrb[0].mxu0
    %1222 = vmatprep.mubr.bf16.mxu0 %v590
    %1223 = vmatmul.mubr.bf16.gmra.mrb[0].mxu0 %v589
    %v1224 = vpop.f32.mrb[0].mxu0
    %v1225 = vadd.f32 %v1084, %v1224
    %v1226 = vpop.f32.mrb[0].mxu0
    %v1227 = vpop.f32.mrb[0].mxu0
    %v1228 = vadd.f32 %v1084, %v1227
    %v1229 = vpop.f32.mrb[0].mxu0
    %1230 = vmatprep.mubr.bf16.mxu0 %v592
    %1231 = vmatmul.mubr.bf16.gmra.mrb[0].mxu0 %v591
    %v1232 = vpop.f32.mrb[0].mxu0
    %v1233 = vadd.f32 %v1084, %v1232
    %v1234 = vpop.f32.mrb[0].mxu0
    %v1235 = vpop.f32.mrb[0].mxu0
    %v1236 = vadd.f32 %v1084, %v1235
    %v1237 = vpop.f32.mrb[0].mxu0
    %1238 = vmatprep.mubr.bf16.mxu0 %v594
    %1239 = vmatmul.mubr.bf16.gmra.mrb[0].mxu0 %v593
    %v1240 = vpop.f32.mrb[0].mxu0
    %v1241 = vadd.f32 %v1084, %v1240
    %v1242 = vpop.f32.mrb[0].mxu0
    %v1243 = vpop.f32.mrb[0].mxu0
    %v1244 = vadd.f32 %v1084, %v1243
    %v1245 = vpop.f32.mrb[0].mxu0
    %1246 = vdwg.mxu0
    %v1247 = vmax.f32 %v1121, 0.0
    %v1248 = vmax.f32 %v1124, 0.0
    %v1249 = vmax.f32 %v1129, 0.0
    %v1250 = vmax.f32 %v1132, 0.0
    %v1251 = vmax.f32 %v1137, 0.0
    %v1252 = vmax.f32 %v1140, 0.0
    %v1253 = vmax.f32 %v1145, 0.0
    %v1254 = vmax.f32 %v1148, 0.0
    %v1255 = vmax.f32 %v1153, 0.0
    %v1256 = vmax.f32 %v1156, 0.0
    %v1257 = vmax.f32 %v1161, 0.0
    %v1258 = vmax.f32 %v1164, 0.0
    %v1259 = vmax.f32 %v1169, 0.0
    %v1260 = vmax.f32 %v1172, 0.0
    %v1261 = vmax.f32 %v1177, 0.0
    %v1262 = vmax.f32 %v1180, 0.0
    %v1263 = vmax.f32 %v1185, 0.0
    %v1264 = vmax.f32 %v1188, 0.0
    %v1265 = vmax.f32 %v1193, 0.0
    %v1266 = vmax.f32 %v1196, 0.0
    %v1267 = vmax.f32 %v1201, 0.0
    %v1268 = vmax.f32 %v1204, 0.0
    %v1269 = vmax.f32 %v1209, 0.0
    %v1270 = vmax.f32 %v1212, 0.0
    %v1271 = vmax.f32 %v1217, 0.0
    %v1272 = vmax.f32 %v1220, 0.0
    %v1273 = vmax.f32 %v1225, 0.0
    %v1274 = vmax.f32 %v1228, 0.0
    %v1275 = vmax.f32 %v1233, 0.0
    %v1276 = vmax.f32 %v1236, 0.0
    %v1277 = vmax.f32 %v1241, 0.0
    %v1278 = vmax.f32 %v1244, 0.0
    %v1279 = vpack.c.bf16 %v1248, %v1247
    %v1280 = vpack.c.bf16 %v1250, %v1249
    %v1281 = vpack.c.bf16 %v1252, %v1251
    %v1282 = vpack.c.bf16 %v1254, %v1253
    %v1283 = vpack.c.bf16 %v1256, %v1255
    %v1284 = vpack.c.bf16 %v1258, %v1257
    %v1285 = vpack.c.bf16 %v1260, %v1259
    %v1286 = vpack.c.bf16 %v1262, %v1261
    %v1287 = vpack.c.bf16 %v1264, %v1263
    %v1288 = vpack.c.bf16 %v1266, %v1265
    %v1289 = vpack.c.bf16 %v1268, %v1267
    %v1290 = vpack.c.bf16 %v1270, %v1269
    %v1291 = vpack.c.bf16 %v1272, %v1271
    %v1292 = vpack.c.bf16 %v1274, %v1273
    %v1293 = vpack.c.bf16 %v1276, %v1275
    %v1294 = vpack.c.bf16 %v1278, %v1277
    %s1295 = scalar_lea.vmem [#allocation6], 128
    %v1296 = vld [vmem:[%s1295] sm:$0xf]
    %v1297 = vld [vmem:[%s1295 + $0x4] sm:$0xf]
    %v1298 = vld [vmem:[%s1295 + $0x8] sm:$0xf]
    %v1299 = vld [vmem:[%s1295 + $0xc] sm:$0xf]
    %v1300 = vld [vmem:[%s1295 + $0x10] sm:$0xf]
    %v1301 = vld [vmem:[%s1295 + $0x14] sm:$0xf]
    %v1302 = vld [vmem:[%s1295 + $0x18] sm:$0xf]
    %v1303 = vld [vmem:[%s1295 + $0x1c] sm:$0xf]
    %v1304 = vld [vmem:[%s1295 + $0x20] sm:$0xf]
    %v1305 = vld [vmem:[%s1295 + $0x24] sm:$0xf]
    %v1306 = vld [vmem:[%s1295 + $0x28] sm:$0xf]
    %v1307 = vld [vmem:[%s1295 + $0x2c] sm:$0xf]
    %v1308 = vld [vmem:[%s1295 + $0x30] sm:$0xf]
    %v1309 = vld [vmem:[%s1295 + $0x34] sm:$0xf]
    %v1310 = vld [vmem:[%s1295 + $0x38] sm:$0xf]
    %v1311 = vld [vmem:[%s1295 + $0x3c] sm:$0xf]
    %v1328 = vunpack.c.l.b16 %v1296
    %v1329 = vunpack.c.l.b16 %v1297
    %v1330 = vunpack.c.l.b16 %v1298
    %v1331 = vunpack.c.l.b16 %v1299
    %v1332 = vunpack.c.l.b16 %v1300
    %v1333 = vunpack.c.l.b16 %v1301
    %v1334 = vunpack.c.l.b16 %v1302
    %v1335 = vunpack.c.l.b16 %v1303
    %v1336 = vunpack.c.l.b16 %v1304
    %v1337 = vunpack.c.l.b16 %v1305
    %v1338 = vunpack.c.l.b16 %v1306
    %v1339 = vunpack.c.l.b16 %v1307
    %v1340 = vunpack.c.l.b16 %v1308
    %v1341 = vunpack.c.l.b16 %v1309
    %v1342 = vunpack.c.l.b16 %v1310
    %v1343 = vunpack.c.l.b16 %v1311
    %v1344 = vpack.c.b16 %v1329, %v1328
    %v1345 = vpack.c.b16 %v1331, %v1330
    %v1346 = vpack.c.b16 %v1333, %v1332
    %v1347 = vpack.c.b16 %v1335, %v1334
    %v1348 = vpack.c.b16 %v1337, %v1336
    %v1349 = vpack.c.b16 %v1339, %v1338
    %v1350 = vpack.c.b16 %v1341, %v1340
    %v1351 = vpack.c.b16 %v1343, %v1342
    %1360 = vmatprep.subr.bf16.mxu0 0
    %1361 = vmatpush1.bf16.msra.mxu0 %v1344
    %1362 = vmatprep.subr.bf16.mxu0 0
    %1363 = vmatpush1.bf16.msra.mxu0 %v1345
    %1364 = vmatprep.subr.bf16.mxu0 0
    %1365 = vmatpush1.bf16.msra.mxu0 %v1346
    %1366 = vmatprep.subr.bf16.mxu0 0
    %1367 = vmatpush1.bf16.msra.mxu0 %v1347
    %1368 = vmatprep.subr.bf16.mxu0 0
    %1369 = vmatpush1.bf16.msra.mxu0 %v1348
    %1370 = vmatprep.subr.bf16.mxu0 0
    %1371 = vmatpush1.bf16.msra.mxu0 %v1349
    %1372 = vmatprep.subr.bf16.mxu0 0
    %1373 = vmatpush1.bf16.msra.mxu0 %v1350
    %1374 = vmatprep.subr.bf16.mxu0 0
    %1375 = vmatpush1.bf16.msra.mxu0 %v1351
    %1376 = vmatprep.subr.bf16.mxu0 0
    %1377 = vmatpush1.bf16.msra.mxu0 0
    %1378 = vmatprep.subr.bf16.mxu0 0
    %1379 = vmatpush1.bf16.msra.mxu0 0
    %1380 = vmatprep.subr.bf16.mxu0 0
    %1381 = vmatpush1.bf16.msra.mxu0 0
    %1382 = vmatprep.subr.bf16.mxu0 0
    %1383 = vmatpush1.bf16.msra.mxu0 0
    %1384 = vmatprep.subr.bf16.mxu0 0
    %1385 = vmatpush1.bf16.msra.mxu0 0
    %1386 = vmatprep.subr.bf16.mxu0 0
    %1387 = vmatpush1.bf16.msra.mxu0 0
    %1388 = vmatprep.subr.bf16.mxu0 0
    %1389 = vmatpush1.bf16.msra.mxu0 0
    %1390 = vmatprep.subr.bf16.mxu0 0
    %1391 = vmatpush1.bf16.msra.mxu0 0
    %1392 = vmatprep.mubr.bf16.mxu0 0
    %1393 = vmatmul.mubr.bf16.gmra.mrb[0].mxu0 %v1279
    %v1394 = vpop.f32.mrb[0].mxu0
    %v1395 = vadd.f32 0.0, %v1394
    %v1396 = vpop.f32.mrb[0].mxu0
    %v1397 = vpop.f32.mrb[0].mxu0
    %v1398 = vadd.f32 0.0, %v1397
    %v1399 = vpop.f32.mrb[0].mxu0
    %1400 = vmatprep.mubr.bf16.mxu0 0
    %1401 = vmatmul.mubr.bf16.gmra.mrb[0].mxu0 %v1280
    %v1402 = vpop.f32.mrb[0].mxu0
    %v1403 = vadd.f32 0.0, %v1402
    %v1404 = vpop.f32.mrb[0].mxu0
    %v1405 = vpop.f32.mrb[0].mxu0
    %v1406 = vadd.f32 0.0, %v1405
    %v1407 = vpop.f32.mrb[0].mxu0
    %1408 = vmatprep.mubr.bf16.mxu0 0
    %1409 = vmatmul.mubr.bf16.gmra.mrb[0].mxu0 %v1281
    %v1410 = vpop.f32.mrb[0].mxu0
    %v1411 = vadd.f32 0.0, %v1410
    %v1412 = vpop.f32.mrb[0].mxu0
    %v1413 = vpop.f32.mrb[0].mxu0
    %v1414 = vadd.f32 0.0, %v1413
    %v1415 = vpop.f32.mrb[0].mxu0
    %1416 = vmatprep.mubr.bf16.mxu0 0
    %1417 = vmatmul.mubr.bf16.gmra.mrb[0].mxu0 %v1282
    %v1418 = vpop.f32.mrb[0].mxu0
    %v1419 = vadd.f32 0.0, %v1418
    %v1420 = vpop.f32.mrb[0].mxu0
    %v1421 = vpop.f32.mrb[0].mxu0
    %v1422 = vadd.f32 0.0, %v1421
    %v1423 = vpop.f32.mrb[0].mxu0
    %1424 = vmatprep.mubr.bf16.mxu0 0
    %1425 = vmatmul.mubr.bf16.gmra.mrb[0].mxu0 %v1283
    %v1426 = vpop.f32.mrb[0].mxu0
    %v1427 = vadd.f32 0.0, %v1426
    %v1428 = vpop.f32.mrb[0].mxu0
    %v1429 = vpop.f32.mrb[0].mxu0
    %v1430 = vadd.f32 0.0, %v1429
    %v1431 = vpop.f32.mrb[0].mxu0
    %1432 = vmatprep.mubr.bf16.mxu0 0
    %1433 = vmatmul.mubr.bf16.gmra.mrb[0].mxu0 %v1284
    %v1434 = vpop.f32.mrb[0].mxu0
    %v1435 = vadd.f32 0.0, %v1434
    %v1436 = vpop.f32.mrb[0].mxu0
    %v1437 = vpop.f32.mrb[0].mxu0
    %v1438 = vadd.f32 0.0, %v1437
    %v1439 = vpop.f32.mrb[0].mxu0
    %1440 = vmatprep.mubr.bf16.mxu0 0
    %1441 = vmatmul.mubr.bf16.gmra.mrb[0].mxu0 %v1285
    %v1442 = vpop.f32.mrb[0].mxu0
    %v1443 = vadd.f32 0.0, %v1442
    %v1444 = vpop.f32.mrb[0].mxu0
    %v1445 = vpop.f32.mrb[0].mxu0
    %v1446 = vadd.f32 0.0, %v1445
    %v1447 = vpop.f32.mrb[0].mxu0
    %1448 = vmatprep.mubr.bf16.mxu0 0
    %1449 = vmatmul.mubr.bf16.gmra.mrb[0].mxu0 %v1286
    %v1450 = vpop.f32.mrb[0].mxu0
    %v1451 = vadd.f32 0.0, %v1450
    %v1452 = vpop.f32.mrb[0].mxu0
    %v1453 = vpop.f32.mrb[0].mxu0
    %v1454 = vadd.f32 0.0, %v1453
    %v1455 = vpop.f32.mrb[0].mxu0
    %1456 = vmatprep.mubr.bf16.mxu0 0
    %1457 = vmatmul.mubr.bf16.gmra.mrb[0].mxu0 %v1287
    %v1458 = vpop.f32.mrb[0].mxu0
    %v1459 = vadd.f32 0.0, %v1458
    %v1460 = vpop.f32.mrb[0].mxu0
    %v1461 = vpop.f32.mrb[0].mxu0
    %v1462 = vadd.f32 0.0, %v1461
    %v1463 = vpop.f32.mrb[0].mxu0
    %1464 = vmatprep.mubr.bf16.mxu0 0
    %1465 = vmatmul.mubr.bf16.gmra.mrb[0].mxu0 %v1288
    %v1466 = vpop.f32.mrb[0].mxu0
    %v1467 = vadd.f32 0.0, %v1466
    %v1468 = vpop.f32.mrb[0].mxu0
    %v1469 = vpop.f32.mrb[0].mxu0
    %v1470 = vadd.f32 0.0, %v1469
    %v1471 = vpop.f32.mrb[0].mxu0
    %1472 = vmatprep.mubr.bf16.mxu0 0
    %1473 = vmatmul.mubr.bf16.gmra.mrb[0].mxu0 %v1289
    %v1474 = vpop.f32.mrb[0].mxu0
    %v1475 = vadd.f32 0.0, %v1474
    %v1476 = vpop.f32.mrb[0].mxu0
    %v1477 = vpop.f32.mrb[0].mxu0
    %v1478 = vadd.f32 0.0, %v1477
    %v1479 = vpop.f32.mrb[0].mxu0
    %1480 = vmatprep.mubr.bf16.mxu0 0
    %1481 = vmatmul.mubr.bf16.gmra.mrb[0].mxu0 %v1290
    %v1482 = vpop.f32.mrb[0].mxu0
    %v1483 = vadd.f32 0.0, %v1482
    %v1484 = vpop.f32.mrb[0].mxu0
    %v1485 = vpop.f32.mrb[0].mxu0
    %v1486 = vadd.f32 0.0, %v1485
    %v1487 = vpop.f32.mrb[0].mxu0
    %1488 = vmatprep.mubr.bf16.mxu0 0
    %1489 = vmatmul.mubr.bf16.gmra.mrb[0].mxu0 %v1291
    %v1490 = vpop.f32.mrb[0].mxu0
    %v1491 = vadd.f32 0.0, %v1490
    %v1492 = vpop.f32.mrb[0].mxu0
    %v1493 = vpop.f32.mrb[0].mxu0
    %v1494 = vadd.f32 0.0, %v1493
    %v1495 = vpop.f32.mrb[0].mxu0
    %1496 = vmatprep.mubr.bf16.mxu0 0
    %1497 = vmatmul.mubr.bf16.gmra.mrb[0].mxu0 %v1292
    %v1498 = vpop.f32.mrb[0].mxu0
    %v1499 = vadd.f32 0.0, %v1498
    %v1500 = vpop.f32.mrb[0].mxu0
    %v1501 = vpop.f32.mrb[0].mxu0
    %v1502 = vadd.f32 0.0, %v1501
    %v1503 = vpop.f32.mrb[0].mxu0
    %1504 = vmatprep.mubr.bf16.mxu0 0
    %1505 = vmatmul.mubr.bf16.gmra.mrb[0].mxu0 %v1293
    %v1506 = vpop.f32.mrb[0].mxu0
    %v1507 = vadd.f32 0.0, %v1506
    %v1508 = vpop.f32.mrb[0].mxu0
    %v1509 = vpop.f32.mrb[0].mxu0
    %v1510 = vadd.f32 0.0, %v1509
    %v1511 = vpop.f32.mrb[0].mxu0
    %1512 = vmatprep.mubr.bf16.mxu0 0
    %1513 = vmatmul.mubr.bf16.gmra.mrb[0].mxu0 %v1294
    %v1514 = vpop.f32.mrb[0].mxu0
    %v1515 = vadd.f32 0.0, %v1514
    %v1516 = vpop.f32.mrb[0].mxu0
    %v1517 = vpop.f32.mrb[0].mxu0
    %v1518 = vadd.f32 0.0, %v1517
    %v1519 = vpop.f32.mrb[0].mxu0
    %1520 = vdwg.mxu0
    %v1521 = vpack.c.bf16 %v1398, %v1395
    %v1522 = vpack.c.bf16 %v1406, %v1403
    %v1523 = vpack.c.bf16 %v1414, %v1411
    %v1524 = vpack.c.bf16 %v1422, %v1419
    %v1525 = vpack.c.bf16 %v1430, %v1427
    %v1526 = vpack.c.bf16 %v1438, %v1435
    %v1527 = vpack.c.bf16 %v1446, %v1443
    %v1528 = vpack.c.bf16 %v1454, %v1451
    %v1529 = vpack.c.bf16 %v1462, %v1459
    %v1530 = vpack.c.bf16 %v1470, %v1467
    %v1531 = vpack.c.bf16 %v1478, %v1475
    %v1532 = vpack.c.bf16 %v1486, %v1483
    %v1533 = vpack.c.bf16 %v1494, %v1491
    %v1534 = vpack.c.bf16 %v1502, %v1499
    %v1535 = vpack.c.bf16 %v1510, %v1507
    %v1536 = vpack.c.bf16 %v1518, %v1515
    %s1537 = scalar_lea.vmem %s3, 2
    %v1538 = vld [vmem:[%s1537] sm:$0x1]
    %v1540 = vlaneseq
    %v1541 = vshrl.u32 %v1540, 7
    %v1542 = vsub.s32 0, %v1541
    %v1543 = vrot.slane %v1538, %v1542
    %1545 = vmatprep.subr.bf16.mxu0 0
    %1546 = vmatpush1.bf16.msra.mxu0 %v1521
    %1547 = vmatprep.subr.bf16.mxu0 0
    %1548 = vmatpush1.bf16.msra.mxu0 %v1522
    %1549 = vmatprep.subr.bf16.mxu0 0
    %1550 = vmatpush1.bf16.msra.mxu0 %v1523
    %1551 = vmatprep.subr.bf16.mxu0 0
    %1552 = vmatpush1.bf16.msra.mxu0 %v1524
    %1553 = vmatprep.subr.bf16.mxu0 0
    %1554 = vmatpush1.bf16.msra.mxu0 %v1525
    %1555 = vmatprep.subr.bf16.mxu0 0
    %1556 = vmatpush1.bf16.msra.mxu0 %v1526
    %1557 = vmatprep.subr.bf16.mxu0 0
    %1558 = vmatpush1.bf16.msra.mxu0 %v1527
    %1559 = vmatprep.subr.bf16.mxu0 0
    %1560 = vmatpush1.bf16.msra.mxu0 %v1528
    %1561 = vmatprep.subr.bf16.mxu0 0
    %1562 = vmatpush1.bf16.msra.mxu0 %v1529
    %1563 = vmatprep.subr.bf16.mxu0 0
    %1564 = vmatpush1.bf16.msra.mxu0 %v1530
    %1565 = vmatprep.subr.bf16.mxu0 0
    %1566 = vmatpush1.bf16.msra.mxu0 %v1531
    %1567 = vmatprep.subr.bf16.mxu0 0
    %1568 = vmatpush1.bf16.msra.mxu0 %v1532
    %1569 = vmatprep.subr.bf16.mxu0 0
    %1570 = vmatpush1.bf16.msra.mxu0 %v1533
    %1571 = vmatprep.subr.bf16.mxu0 0
    %1572 = vmatpush1.bf16.msra.mxu0 %v1534
    %1573 = vmatprep.subr.bf16.mxu0 0
    %1574 = vmatpush1.bf16.msra.mxu0 %v1535
    %1575 = vmatprep.subr.bf16.mxu0 0
    %1576 = vmatpush1.bf16.msra.mxu0 %v1536
    %1577 = vmatprep.mubr.bf16.mxu0 %v564
    %1578 = vmatmul.mubr.bf16.gmra.mrb[0].mxu0 %v563
    %v1579 = vpop.f32.mrb[0].mxu0
    %v1580 = vadd.f32 %v1543, %v1579
    %v1581 = vpop.f32.mrb[0].mxu0
    %v1582 = vpop.f32.mrb[0].mxu0
    %v1583 = vadd.f32 %v1543, %v1582
    %v1584 = vpop.f32.mrb[0].mxu0
    %1585 = vmatprep.mubr.bf16.mxu0 %v566
    %1586 = vmatmul.mubr.bf16.gmra.mrb[0].mxu0 %v565
    %v1587 = vpop.f32.mrb[0].mxu0
    %v1588 = vadd.f32 %v1543, %v1587
    %v1589 = vpop.f32.mrb[0].mxu0
    %v1590 = vpop.f32.mrb[0].mxu0
    %v1591 = vadd.f32 %v1543, %v1590
    %v1592 = vpop.f32.mrb[0].mxu0
    %1593 = vmatprep.mubr.bf16.mxu0 %v568
    %1594 = vmatmul.mubr.bf16.gmra.mrb[0].mxu0 %v567
    %v1595 = vpop.f32.mrb[0].mxu0
    %v1596 = vadd.f32 %v1543, %v1595
    %v1597 = vpop.f32.mrb[0].mxu0
    %v1598 = vpop.f32.mrb[0].mxu0
    %v1599 = vadd.f32 %v1543, %v1598
    %v1600 = vpop.f32.mrb[0].mxu0
    %1601 = vmatprep.mubr.bf16.mxu0 %v570
    %1602 = vmatmul.mubr.bf16.gmra.mrb[0].mxu0 %v569
    %v1603 = vpop.f32.mrb[0].mxu0
    %v1604 = vadd.f32 %v1543, %v1603
    %v1605 = vpop.f32.mrb[0].mxu0
    %v1606 = vpop.f32.mrb[0].mxu0
    %v1607 = vadd.f32 %v1543, %v1606
    %v1608 = vpop.f32.mrb[0].mxu0
    %1609 = vmatprep.mubr.bf16.mxu0 %v572
    %1610 = vmatmul.mubr.bf16.gmra.mrb[0].mxu0 %v571
    %v1611 = vpop.f32.mrb[0].mxu0
    %v1612 = vadd.f32 %v1543, %v1611
    %v1613 = vpop.f32.mrb[0].mxu0
    %v1614 = vpop.f32.mrb[0].mxu0
    %v1615 = vadd.f32 %v1543, %v1614
    %v1616 = vpop.f32.mrb[0].mxu0
    %1617 = vmatprep.mubr.bf16.mxu0 %v574
    %1618 = vmatmul.mubr.bf16.gmra.mrb[0].mxu0 %v573
    %v1619 = vpop.f32.mrb[0].mxu0
    %v1620 = vadd.f32 %v1543, %v1619
    %v1621 = vpop.f32.mrb[0].mxu0
    %v1622 = vpop.f32.mrb[0].mxu0
    %v1623 = vadd.f32 %v1543, %v1622
    %v1624 = vpop.f32.mrb[0].mxu0
    %1625 = vmatprep.mubr.bf16.mxu0 %v576
    %1626 = vmatmul.mubr.bf16.gmra.mrb[0].mxu0 %v575
    %v1627 = vpop.f32.mrb[0].mxu0
    %v1628 = vadd.f32 %v1543, %v1627
    %v1629 = vpop.f32.mrb[0].mxu0
    %v1630 = vpop.f32.mrb[0].mxu0
    %v1631 = vadd.f32 %v1543, %v1630
    %v1632 = vpop.f32.mrb[0].mxu0
    %1633 = vmatprep.mubr.bf16.mxu0 %v578
    %1634 = vmatmul.mubr.bf16.gmra.mrb[0].mxu0 %v577
    %v1635 = vpop.f32.mrb[0].mxu0
    %v1636 = vadd.f32 %v1543, %v1635
    %v1637 = vpop.f32.mrb[0].mxu0
    %v1638 = vpop.f32.mrb[0].mxu0
    %v1639 = vadd.f32 %v1543, %v1638
    %v1640 = vpop.f32.mrb[0].mxu0
    %1641 = vmatprep.mubr.bf16.mxu0 %v580
    %1642 = vmatmul.mubr.bf16.gmra.mrb[0].mxu0 %v579
    %v1643 = vpop.f32.mrb[0].mxu0
    %v1644 = vadd.f32 %v1543, %v1643
    %v1645 = vpop.f32.mrb[0].mxu0
    %v1646 = vpop.f32.mrb[0].mxu0
    %v1647 = vadd.f32 %v1543, %v1646
    %v1648 = vpop.f32.mrb[0].mxu0
    %1649 = vmatprep.mubr.bf16.mxu0 %v582
    %1650 = vmatmul.mubr.bf16.gmra.mrb[0].mxu0 %v581
    %v1651 = vpop.f32.mrb[0].mxu0
    %v1652 = vadd.f32 %v1543, %v1651
    %v1653 = vpop.f32.mrb[0].mxu0
    %v1654 = vpop.f32.mrb[0].mxu0
    %v1655 = vadd.f32 %v1543, %v1654
    %v1656 = vpop.f32.mrb[0].mxu0
    %1657 = vmatprep.mubr.bf16.mxu0 %v584
    %1658 = vmatmul.mubr.bf16.gmra.mrb[0].mxu0 %v583
    %v1659 = vpop.f32.mrb[0].mxu0
    %v1660 = vadd.f32 %v1543, %v1659
    %v1661 = vpop.f32.mrb[0].mxu0
    %v1662 = vpop.f32.mrb[0].mxu0
    %v1663 = vadd.f32 %v1543, %v1662
    %v1664 = vpop.f32.mrb[0].mxu0
    %1665 = vmatprep.mubr.bf16.mxu0 %v586
    %1666 = vmatmul.mubr.bf16.gmra.mrb[0].mxu0 %v585
    %v1667 = vpop.f32.mrb[0].mxu0
    %v1668 = vadd.f32 %v1543, %v1667
    %v1669 = vpop.f32.mrb[0].mxu0
    %v1670 = vpop.f32.mrb[0].mxu0
    %v1671 = vadd.f32 %v1543, %v1670
    %v1672 = vpop.f32.mrb[0].mxu0
    %1673 = vmatprep.mubr.bf16.mxu0 %v588
    %1674 = vmatmul.mubr.bf16.gmra.mrb[0].mxu0 %v587
    %v1675 = vpop.f32.mrb[0].mxu0
    %v1676 = vadd.f32 %v1543, %v1675
    %v1677 = vpop.f32.mrb[0].mxu0
    %v1678 = vpop.f32.mrb[0].mxu0
    %v1679 = vadd.f32 %v1543, %v1678
    %v1680 = vpop.f32.mrb[0].mxu0
    %1681 = vmatprep.mubr.bf16.mxu0 %v590
    %1682 = vmatmul.mubr.bf16.gmra.mrb[0].mxu0 %v589
    %v1683 = vpop.f32.mrb[0].mxu0
    %v1684 = vadd.f32 %v1543, %v1683
    %v1685 = vpop.f32.mrb[0].mxu0
    %v1686 = vpop.f32.mrb[0].mxu0
    %v1687 = vadd.f32 %v1543, %v1686
    %v1688 = vpop.f32.mrb[0].mxu0
    %1689 = vmatprep.mubr.bf16.mxu0 %v592
    %1690 = vmatmul.mubr.bf16.gmra.mrb[0].mxu0 %v591
    %v1691 = vpop.f32.mrb[0].mxu0
    %v1692 = vadd.f32 %v1543, %v1691
    %v1693 = vpop.f32.mrb[0].mxu0
    %v1694 = vpop.f32.mrb[0].mxu0
    %v1695 = vadd.f32 %v1543, %v1694
    %v1696 = vpop.f32.mrb[0].mxu0
    %1697 = vmatprep.mubr.bf16.mxu0 %v594
    %1698 = vmatmul.mubr.bf16.gmra.mrb[0].mxu0 %v593
    %v1699 = vpop.f32.mrb[0].mxu0
    %v1700 = vadd.f32 %v1543, %v1699
    %v1701 = vpop.f32.mrb[0].mxu0
    %v1702 = vpop.f32.mrb[0].mxu0
    %v1703 = vadd.f32 %v1543, %v1702
    %v1704 = vpop.f32.mrb[0].mxu0
    %1705 = vdwg.mxu0
    %v1706 = vmax.f32 %v1580, 0.0
    %v1707 = vmax.f32 %v1583, 0.0
    %v1708 = vmax.f32 %v1588, 0.0
    %v1709 = vmax.f32 %v1591, 0.0
    %v1710 = vmax.f32 %v1596, 0.0
    %v1711 = vmax.f32 %v1599, 0.0
    %v1712 = vmax.f32 %v1604, 0.0
    %v1713 = vmax.f32 %v1607, 0.0
    %v1714 = vmax.f32 %v1612, 0.0
    %v1715 = vmax.f32 %v1615, 0.0
    %v1716 = vmax.f32 %v1620, 0.0
    %v1717 = vmax.f32 %v1623, 0.0
    %v1718 = vmax.f32 %v1628, 0.0
    %v1719 = vmax.f32 %v1631, 0.0
    %v1720 = vmax.f32 %v1636, 0.0
    %v1721 = vmax.f32 %v1639, 0.0
    %v1722 = vmax.f32 %v1644, 0.0
    %v1723 = vmax.f32 %v1647, 0.0
    %v1724 = vmax.f32 %v1652, 0.0
    %v1725 = vmax.f32 %v1655, 0.0
    %v1726 = vmax.f32 %v1660, 0.0
    %v1727 = vmax.f32 %v1663, 0.0
    %v1728 = vmax.f32 %v1668, 0.0
    %v1729 = vmax.f32 %v1671, 0.0
    %v1730 = vmax.f32 %v1676, 0.0
    %v1731 = vmax.f32 %v1679, 0.0
    %v1732 = vmax.f32 %v1684, 0.0
    %v1733 = vmax.f32 %v1687, 0.0
    %v1734 = vmax.f32 %v1692, 0.0
    %v1735 = vmax.f32 %v1695, 0.0
    %v1736 = vmax.f32 %v1700, 0.0
    %v1737 = vmax.f32 %v1703, 0.0
    %v1738 = vpack.c.bf16 %v1707, %v1706
    %v1739 = vpack.c.bf16 %v1709, %v1708
    %v1740 = vpack.c.bf16 %v1711, %v1710
    %v1741 = vpack.c.bf16 %v1713, %v1712
    %v1742 = vpack.c.bf16 %v1715, %v1714
    %v1743 = vpack.c.bf16 %v1717, %v1716
    %v1744 = vpack.c.bf16 %v1719, %v1718
    %v1745 = vpack.c.bf16 %v1721, %v1720
    %v1746 = vpack.c.bf16 %v1723, %v1722
    %v1747 = vpack.c.bf16 %v1725, %v1724
    %v1748 = vpack.c.bf16 %v1727, %v1726
    %v1749 = vpack.c.bf16 %v1729, %v1728
    %v1750 = vpack.c.bf16 %v1731, %v1730
    %v1751 = vpack.c.bf16 %v1733, %v1732
    %v1752 = vpack.c.bf16 %v1735, %v1734
    %v1753 = vpack.c.bf16 %v1737, %v1736
    %s1754 = scalar_lea.vmem [#allocation6], 192
    %v1755 = vld [vmem:[%s1754] sm:$0xf]
    %v1756 = vld [vmem:[%s1754 + $0x4] sm:$0xf]
    %v1757 = vld [vmem:[%s1754 + $0x8] sm:$0xf]
    %v1758 = vld [vmem:[%s1754 + $0xc] sm:$0xf]
    %v1759 = vld [vmem:[%s1754 + $0x10] sm:$0xf]
    %v1760 = vld [vmem:[%s1754 + $0x14] sm:$0xf]
    %v1761 = vld [vmem:[%s1754 + $0x18] sm:$0xf]
    %v1762 = vld [vmem:[%s1754 + $0x1c] sm:$0xf]
    %v1763 = vld [vmem:[%s1754 + $0x20] sm:$0xf]
    %v1764 = vld [vmem:[%s1754 + $0x24] sm:$0xf]
    %v1765 = vld [vmem:[%s1754 + $0x28] sm:$0xf]
    %v1766 = vld [vmem:[%s1754 + $0x2c] sm:$0xf]
    %v1767 = vld [vmem:[%s1754 + $0x30] sm:$0xf]
    %v1768 = vld [vmem:[%s1754 + $0x34] sm:$0xf]
    %v1769 = vld [vmem:[%s1754 + $0x38] sm:$0xf]
    %v1770 = vld [vmem:[%s1754 + $0x3c] sm:$0xf]
    %v1787 = vunpack.c.l.b16 %v1755
    %v1788 = vunpack.c.l.b16 %v1756
    %v1789 = vunpack.c.l.b16 %v1757
    %v1790 = vunpack.c.l.b16 %v1758
    %v1791 = vunpack.c.l.b16 %v1759
    %v1792 = vunpack.c.l.b16 %v1760
    %v1793 = vunpack.c.l.b16 %v1761
    %v1794 = vunpack.c.l.b16 %v1762
    %v1795 = vunpack.c.l.b16 %v1763
    %v1796 = vunpack.c.l.b16 %v1764
    %v1797 = vunpack.c.l.b16 %v1765
    %v1798 = vunpack.c.l.b16 %v1766
    %v1799 = vunpack.c.l.b16 %v1767
    %v1800 = vunpack.c.l.b16 %v1768
    %v1801 = vunpack.c.l.b16 %v1769
    %v1802 = vunpack.c.l.b16 %v1770
    %v1803 = vpack.c.b16 %v1788, %v1787
    %v1804 = vpack.c.b16 %v1790, %v1789
    %v1805 = vpack.c.b16 %v1792, %v1791
    %v1806 = vpack.c.b16 %v1794, %v1793
    %v1807 = vpack.c.b16 %v1796, %v1795
    %v1808 = vpack.c.b16 %v1798, %v1797
    %v1809 = vpack.c.b16 %v1800, %v1799
    %v1810 = vpack.c.b16 %v1802, %v1801
    %1819 = vmatprep.subr.bf16.mxu0 0
    %1820 = vmatpush1.bf16.msra.mxu0 %v1803
    %1821 = vmatprep.subr.bf16.mxu0 0
    %1822 = vmatpush1.bf16.msra.mxu0 %v1804
    %1823 = vmatprep.subr.bf16.mxu0 0
    %1824 = vmatpush1.bf16.msra.mxu0 %v1805
    %1825 = vmatprep.subr.bf16.mxu0 0
    %1826 = vmatpush1.bf16.msra.mxu0 %v1806
    %1827 = vmatprep.subr.bf16.mxu0 0
    %1828 = vmatpush1.bf16.msra.mxu0 %v1807
    %1829 = vmatprep.subr.bf16.mxu0 0
    %1830 = vmatpush1.bf16.msra.mxu0 %v1808
    %1831 = vmatprep.subr.bf16.mxu0 0
    %1832 = vmatpush1.bf16.msra.mxu0 %v1809
    %1833 = vmatprep.subr.bf16.mxu0 0
    %1834 = vmatpush1.bf16.msra.mxu0 %v1810
    %1835 = vmatprep.subr.bf16.mxu0 0
    %1836 = vmatpush1.bf16.msra.mxu0 0
    %1837 = vmatprep.subr.bf16.mxu0 0
    %1838 = vmatpush1.bf16.msra.mxu0 0
    %1839 = vmatprep.subr.bf16.mxu0 0
    %1840 = vmatpush1.bf16.msra.mxu0 0
    %1841 = vmatprep.subr.bf16.mxu0 0
    %1842 = vmatpush1.bf16.msra.mxu0 0
    %1843 = vmatprep.subr.bf16.mxu0 0
    %1844 = vmatpush1.bf16.msra.mxu0 0
    %1845 = vmatprep.subr.bf16.mxu0 0
    %1846 = vmatpush1.bf16.msra.mxu0 0
    %1847 = vmatprep.subr.bf16.mxu0 0
    %1848 = vmatpush1.bf16.msra.mxu0 0
    %1849 = vmatprep.subr.bf16.mxu0 0
    %1850 = vmatpush1.bf16.msra.mxu0 0
    %1851 = vmatprep.mubr.bf16.mxu0 0
    %1852 = vmatmul.mubr.bf16.gmra.mrb[0].mxu0 %v1738
    %v1853 = vpop.f32.mrb[0].mxu0
    %v1854 = vadd.f32 0.0, %v1853
    %v1855 = vpop.f32.mrb[0].mxu0
    %v1856 = vpop.f32.mrb[0].mxu0
    %v1857 = vadd.f32 0.0, %v1856
    %v1858 = vpop.f32.mrb[0].mxu0
    %1859 = vmatprep.mubr.bf16.mxu0 0
    %1860 = vmatmul.mubr.bf16.gmra.mrb[0].mxu0 %v1739
    %v1861 = vpop.f32.mrb[0].mxu0
    %v1862 = vadd.f32 0.0, %v1861
    %v1863 = vpop.f32.mrb[0].mxu0
    %v1864 = vpop.f32.mrb[0].mxu0
    %v1865 = vadd.f32 0.0, %v1864
    %v1866 = vpop.f32.mrb[0].mxu0
    %1867 = vmatprep.mubr.bf16.mxu0 0
    %1868 = vmatmul.mubr.bf16.gmra.mrb[0].mxu0 %v1740
    %v1869 = vpop.f32.mrb[0].mxu0
    %v1870 = vadd.f32 0.0, %v1869
    %v1871 = vpop.f32.mrb[0].mxu0
    %v1872 = vpop.f32.mrb[0].mxu0
    %v1873 = vadd.f32 0.0, %v1872
    %v1874 = vpop.f32.mrb[0].mxu0
    %1875 = vmatprep.mubr.bf16.mxu0 0
    %1876 = vmatmul.mubr.bf16.gmra.mrb[0].mxu0 %v1741
    %v1877 = vpop.f32.mrb[0].mxu0
    %v1878 = vadd.f32 0.0, %v1877
    %v1879 = vpop.f32.mrb[0].mxu0
    %v1880 = vpop.f32.mrb[0].mxu0
    %v1881 = vadd.f32 0.0, %v1880
    %v1882 = vpop.f32.mrb[0].mxu0
    %1883 = vmatprep.mubr.bf16.mxu0 0
    %1884 = vmatmul.mubr.bf16.gmra.mrb[0].mxu0 %v1742
    %v1885 = vpop.f32.mrb[0].mxu0
    %v1886 = vadd.f32 0.0, %v1885
    %v1887 = vpop.f32.mrb[0].mxu0
    %v1888 = vpop.f32.mrb[0].mxu0
    %v1889 = vadd.f32 0.0, %v1888
    %v1890 = vpop.f32.mrb[0].mxu0
    %1891 = vmatprep.mubr.bf16.mxu0 0
    %1892 = vmatmul.mubr.bf16.gmra.mrb[0].mxu0 %v1743
    %v1893 = vpop.f32.mrb[0].mxu0
    %v1894 = vadd.f32 0.0, %v1893
    %v1895 = vpop.f32.mrb[0].mxu0
    %v1896 = vpop.f32.mrb[0].mxu0
    %v1897 = vadd.f32 0.0, %v1896
    %v1898 = vpop.f32.mrb[0].mxu0
    %1899 = vmatprep.mubr.bf16.mxu0 0
    %1900 = vmatmul.mubr.bf16.gmra.mrb[0].mxu0 %v1744
    %v1901 = vpop.f32.mrb[0].mxu0
    %v1902 = vadd.f32 0.0, %v1901
    %v1903 = vpop.f32.mrb[0].mxu0
    %v1904 = vpop.f32.mrb[0].mxu0
    %v1905 = vadd.f32 0.0, %v1904
    %v1906 = vpop.f32.mrb[0].mxu0
    %1907 = vmatprep.mubr.bf16.mxu0 0
    %1908 = vmatmul.mubr.bf16.gmra.mrb[0].mxu0 %v1745
    %v1909 = vpop.f32.mrb[0].mxu0
    %v1910 = vadd.f32 0.0, %v1909
    %v1911 = vpop.f32.mrb[0].mxu0
    %v1912 = vpop.f32.mrb[0].mxu0
    %v1913 = vadd.f32 0.0, %v1912
    %v1914 = vpop.f32.mrb[0].mxu0
    %1915 = vmatprep.mubr.bf16.mxu0 0
    %1916 = vmatmul.mubr.bf16.gmra.mrb[0].mxu0 %v1746
    %v1917 = vpop.f32.mrb[0].mxu0
    %v1918 = vadd.f32 0.0, %v1917
    %v1919 = vpop.f32.mrb[0].mxu0
    %v1920 = vpop.f32.mrb[0].mxu0
    %v1921 = vadd.f32 0.0, %v1920
    %v1922 = vpop.f32.mrb[0].mxu0
    %1923 = vmatprep.mubr.bf16.mxu0 0
    %1924 = vmatmul.mubr.bf16.gmra.mrb[0].mxu0 %v1747
    %v1925 = vpop.f32.mrb[0].mxu0
    %v1926 = vadd.f32 0.0, %v1925
    %v1927 = vpop.f32.mrb[0].mxu0
    %v1928 = vpop.f32.mrb[0].mxu0
    %v1929 = vadd.f32 0.0, %v1928
    %v1930 = vpop.f32.mrb[0].mxu0
    %1931 = vmatprep.mubr.bf16.mxu0 0
    %1932 = vmatmul.mubr.bf16.gmra.mrb[0].mxu0 %v1748
    %v1933 = vpop.f32.mrb[0].mxu0
    %v1934 = vadd.f32 0.0, %v1933
    %v1935 = vpop.f32.mrb[0].mxu0
    %v1936 = vpop.f32.mrb[0].mxu0
    %v1937 = vadd.f32 0.0, %v1936
    %v1938 = vpop.f32.mrb[0].mxu0
    %1939 = vmatprep.mubr.bf16.mxu0 0
    %1940 = vmatmul.mubr.bf16.gmra.mrb[0].mxu0 %v1749
    %v1941 = vpop.f32.mrb[0].mxu0
    %v1942 = vadd.f32 0.0, %v1941
    %v1943 = vpop.f32.mrb[0].mxu0
    %v1944 = vpop.f32.mrb[0].mxu0
    %v1945 = vadd.f32 0.0, %v1944
    %v1946 = vpop.f32.mrb[0].mxu0
    %1947 = vmatprep.mubr.bf16.mxu0 0
    %1948 = vmatmul.mubr.bf16.gmra.mrb[0].mxu0 %v1750
    %v1949 = vpop.f32.mrb[0].mxu0
    %v1950 = vadd.f32 0.0, %v1949
    %v1951 = vpop.f32.mrb[0].mxu0
    %v1952 = vpop.f32.mrb[0].mxu0
    %v1953 = vadd.f32 0.0, %v1952
    %v1954 = vpop.f32.mrb[0].mxu0
    %1955 = vmatprep.mubr.bf16.mxu0 0
    %1956 = vmatmul.mubr.bf16.gmra.mrb[0].mxu0 %v1751
    %v1957 = vpop.f32.mrb[0].mxu0
    %v1958 = vadd.f32 0.0, %v1957
    %v1959 = vpop.f32.mrb[0].mxu0
    %v1960 = vpop.f32.mrb[0].mxu0
    %v1961 = vadd.f32 0.0, %v1960
    %v1962 = vpop.f32.mrb[0].mxu0
    %1963 = vmatprep.mubr.bf16.mxu0 0
    %1964 = vmatmul.mubr.bf16.gmra.mrb[0].mxu0 %v1752
    %v1965 = vpop.f32.mrb[0].mxu0
    %v1966 = vadd.f32 0.0, %v1965
    %v1967 = vpop.f32.mrb[0].mxu0
    %v1968 = vpop.f32.mrb[0].mxu0
    %v1969 = vadd.f32 0.0, %v1968
    %v1970 = vpop.f32.mrb[0].mxu0
    %1971 = vmatprep.mubr.bf16.mxu0 0
    %1972 = vmatmul.mubr.bf16.gmra.mrb[0].mxu0 %v1753
    %v1973 = vpop.f32.mrb[0].mxu0
    %v1974 = vadd.f32 0.0, %v1973
    %v1975 = vpop.f32.mrb[0].mxu0
    %v1976 = vpop.f32.mrb[0].mxu0
    %v1977 = vadd.f32 0.0, %v1976
    %v1978 = vpop.f32.mrb[0].mxu0
    %1979 = vdwg.mxu0
    %v1980 = vpack.c.bf16 %v1857, %v1854
    %v1981 = vpack.c.bf16 %v1865, %v1862
    %v1982 = vpack.c.bf16 %v1873, %v1870
    %v1983 = vpack.c.bf16 %v1881, %v1878
    %v1984 = vpack.c.bf16 %v1889, %v1886
    %v1985 = vpack.c.bf16 %v1897, %v1894
    %v1986 = vpack.c.bf16 %v1905, %v1902
    %v1987 = vpack.c.bf16 %v1913, %v1910
    %v1988 = vpack.c.bf16 %v1921, %v1918
    %v1989 = vpack.c.bf16 %v1929, %v1926
    %v1990 = vpack.c.bf16 %v1937, %v1934
    %v1991 = vpack.c.bf16 %v1945, %v1942
    %v1992 = vpack.c.bf16 %v1953, %v1950
    %v1993 = vpack.c.bf16 %v1961, %v1958
    %v1994 = vpack.c.bf16 %v1969, %v1966
    %v1995 = vpack.c.bf16 %v1977, %v1974
    %s1996 = scalar_lea.vmem %s3, 3
    %v1997 = vld [vmem:[%s1996] sm:$0x1]
    %v1999 = vlaneseq
    %v2000 = vshrl.u32 %v1999, 7
    %v2001 = vsub.s32 0, %v2000
    %v2002 = vrot.slane %v1997, %v2001
    %2004 = vmatprep.subr.bf16.mxu0 0
    %2005 = vmatpush1.bf16.msra.mxu0 %v1980
    %2006 = vmatprep.subr.bf16.mxu0 0
    %2007 = vmatpush1.bf16.msra.mxu0 %v1981
    %2008 = vmatprep.subr.bf16.mxu0 0
    %2009 = vmatpush1.bf16.msra.mxu0 %v1982
    %2010 = vmatprep.subr.bf16.mxu0 0
    %2011 = vmatpush1.bf16.msra.mxu0 %v1983
    %2012 = vmatprep.subr.bf16.mxu0 0
    %2013 = vmatpush1.bf16.msra.mxu0 %v1984
    %2014 = vmatprep.subr.bf16.mxu0 0
    %2015 = vmatpush1.bf16.msra.mxu0 %v1985
    %2016 = vmatprep.subr.bf16.mxu0 0
    %2017 = vmatpush1.bf16.msra.mxu0 %v1986
    %2018 = vmatprep.subr.bf16.mxu0 0
    %2019 = vmatpush1.bf16.msra.mxu0 %v1987
    %2020 = vmatprep.subr.bf16.mxu0 0
    %2021 = vmatpush1.bf16.msra.mxu0 %v1988
    %2022 = vmatprep.subr.bf16.mxu0 0
    %2023 = vmatpush1.bf16.msra.mxu0 %v1989
    %2024 = vmatprep.subr.bf16.mxu0 0
    %2025 = vmatpush1.bf16.msra.mxu0 %v1990
    %2026 = vmatprep.subr.bf16.mxu0 0
    %2027 = vmatpush1.bf16.msra.mxu0 %v1991
    %2028 = vmatprep.subr.bf16.mxu0 0
    %2029 = vmatpush1.bf16.msra.mxu0 %v1992
    %2030 = vmatprep.subr.bf16.mxu0 0
    %2031 = vmatpush1.bf16.msra.mxu0 %v1993
    %2032 = vmatprep.subr.bf16.mxu0 0
    %2033 = vmatpush1.bf16.msra.mxu0 %v1994
    %2034 = vmatprep.subr.bf16.mxu0 0
    %2035 = vmatpush1.bf16.msra.mxu0 %v1995
    %2036 = vmatprep.mubr.bf16.mxu0 %v564
    %2037 = vmatmul.mubr.bf16.gmra.mrb[0].mxu0 %v563
    %v2038 = vpop.f32.mrb[0].mxu0
    %v2039 = vadd.f32 %v2002, %v2038
    %v2040 = vpop.f32.mrb[0].mxu0
    %v2041 = vpop.f32.mrb[0].mxu0
    %v2042 = vadd.f32 %v2002, %v2041
    %v2043 = vpop.f32.mrb[0].mxu0
    %2044 = vmatprep.mubr.bf16.mxu0 %v566
    %2045 = vmatmul.mubr.bf16.gmra.mrb[0].mxu0 %v565
    %v2046 = vpop.f32.mrb[0].mxu0
    %v2047 = vadd.f32 %v2002, %v2046
    %v2048 = vpop.f32.mrb[0].mxu0
    %v2049 = vpop.f32.mrb[0].mxu0
    %v2050 = vadd.f32 %v2002, %v2049
    %v2051 = vpop.f32.mrb[0].mxu0
    %2052 = vmatprep.mubr.bf16.mxu0 %v568
    %2053 = vmatmul.mubr.bf16.gmra.mrb[0].mxu0 %v567
    %v2054 = vpop.f32.mrb[0].mxu0
    %v2055 = vadd.f32 %v2002, %v2054
    %v2056 = vpop.f32.mrb[0].mxu0
    %v2057 = vpop.f32.mrb[0].mxu0
    %v2058 = vadd.f32 %v2002, %v2057
    %v2059 = vpop.f32.mrb[0].mxu0
    %2060 = vmatprep.mubr.bf16.mxu0 %v570
    %2061 = vmatmul.mubr.bf16.gmra.mrb[0].mxu0 %v569
    %v2062 = vpop.f32.mrb[0].mxu0
    %v2063 = vadd.f32 %v2002, %v2062
    %v2064 = vpop.f32.mrb[0].mxu0
    %v2065 = vpop.f32.mrb[0].mxu0
    %v2066 = vadd.f32 %v2002, %v2065
    %v2067 = vpop.f32.mrb[0].mxu0
    %2068 = vmatprep.mubr.bf16.mxu0 %v572
    %2069 = vmatmul.mubr.bf16.gmra.mrb[0].mxu0 %v571
    %v2070 = vpop.f32.mrb[0].mxu0
    %v2071 = vadd.f32 %v2002, %v2070
    %v2072 = vpop.f32.mrb[0].mxu0
    %v2073 = vpop.f32.mrb[0].mxu0
    %v2074 = vadd.f32 %v2002, %v2073
    %v2075 = vpop.f32.mrb[0].mxu0
    %2076 = vmatprep.mubr.bf16.mxu0 %v574
    %2077 = vmatmul.mubr.bf16.gmra.mrb[0].mxu0 %v573
    %v2078 = vpop.f32.mrb[0].mxu0
    %v2079 = vadd.f32 %v2002, %v2078
    %v2080 = vpop.f32.mrb[0].mxu0
    %v2081 = vpop.f32.mrb[0].mxu0
    %v2082 = vadd.f32 %v2002, %v2081
    %v2083 = vpop.f32.mrb[0].mxu0
    %2084 = vmatprep.mubr.bf16.mxu0 %v576
    %2085 = vmatmul.mubr.bf16.gmra.mrb[0].mxu0 %v575
    %v2086 = vpop.f32.mrb[0].mxu0
    %v2087 = vadd.f32 %v2002, %v2086
    %v2088 = vpop.f32.mrb[0].mxu0
    %v2089 = vpop.f32.mrb[0].mxu0
    %v2090 = vadd.f32 %v2002, %v2089
    %v2091 = vpop.f32.mrb[0].mxu0
    %2092 = vmatprep.mubr.bf16.mxu0 %v578
    %2093 = vmatmul.mubr.bf16.gmra.mrb[0].mxu0 %v577
    %v2094 = vpop.f32.mrb[0].mxu0
    %v2095 = vadd.f32 %v2002, %v2094
    %v2096 = vpop.f32.mrb[0].mxu0
    %v2097 = vpop.f32.mrb[0].mxu0
    %v2098 = vadd.f32 %v2002, %v2097
    %v2099 = vpop.f32.mrb[0].mxu0
    %2100 = vmatprep.mubr.bf16.mxu0 %v580
    %2101 = vmatmul.mubr.bf16.gmra.mrb[0].mxu0 %v579
    %v2102 = vpop.f32.mrb[0].mxu0
    %v2103 = vadd.f32 %v2002, %v2102
    %v2104 = vpop.f32.mrb[0].mxu0
    %v2105 = vpop.f32.mrb[0].mxu0
    %v2106 = vadd.f32 %v2002, %v2105
    %v2107 = vpop.f32.mrb[0].mxu0
    %2108 = vmatprep.mubr.bf16.mxu0 %v582
    %2109 = vmatmul.mubr.bf16.gmra.mrb[0].mxu0 %v581
    %v2110 = vpop.f32.mrb[0].mxu0
    %v2111 = vadd.f32 %v2002, %v2110
    %v2112 = vpop.f32.mrb[0].mxu0
    %v2113 = vpop.f32.mrb[0].mxu0
    %v2114 = vadd.f32 %v2002, %v2113
    %v2115 = vpop.f32.mrb[0].mxu0
    %2116 = vmatprep.mubr.bf16.mxu0 %v584
    %2117 = vmatmul.mubr.bf16.gmra.mrb[0].mxu0 %v583
    %v2118 = vpop.f32.mrb[0].mxu0
    %v2119 = vadd.f32 %v2002, %v2118
    %v2120 = vpop.f32.mrb[0].mxu0
    %v2121 = vpop.f32.mrb[0].mxu0
    %v2122 = vadd.f32 %v2002, %v2121
    %v2123 = vpop.f32.mrb[0].mxu0
    %2124 = vmatprep.mubr.bf16.mxu0 %v586
    %2125 = vmatmul.mubr.bf16.gmra.mrb[0].mxu0 %v585
    %v2126 = vpop.f32.mrb[0].mxu0
    %v2127 = vadd.f32 %v2002, %v2126
    %v2128 = vpop.f32.mrb[0].mxu0
    %v2129 = vpop.f32.mrb[0].mxu0
    %v2130 = vadd.f32 %v2002, %v2129
    %v2131 = vpop.f32.mrb[0].mxu0
    %2132 = vmatprep.mubr.bf16.mxu0 %v588
    %2133 = vmatmul.mubr.bf16.gmra.mrb[0].mxu0 %v587
    %v2134 = vpop.f32.mrb[0].mxu0
    %v2135 = vadd.f32 %v2002, %v2134
    %v2136 = vpop.f32.mrb[0].mxu0
    %v2137 = vpop.f32.mrb[0].mxu0
    %v2138 = vadd.f32 %v2002, %v2137
    %v2139 = vpop.f32.mrb[0].mxu0
    %2140 = vmatprep.mubr.bf16.mxu0 %v590
    %2141 = vmatmul.mubr.bf16.gmra.mrb[0].mxu0 %v589
    %v2142 = vpop.f32.mrb[0].mxu0
    %v2143 = vadd.f32 %v2002, %v2142
    %v2144 = vpop.f32.mrb[0].mxu0
    %v2145 = vpop.f32.mrb[0].mxu0
    %v2146 = vadd.f32 %v2002, %v2145
    %v2147 = vpop.f32.mrb[0].mxu0
    %2148 = vmatprep.mubr.bf16.mxu0 %v592
    %2149 = vmatmul.mubr.bf16.gmra.mrb[0].mxu0 %v591
    %v2150 = vpop.f32.mrb[0].mxu0
    %v2151 = vadd.f32 %v2002, %v2150
    %v2152 = vpop.f32.mrb[0].mxu0
    %v2153 = vpop.f32.mrb[0].mxu0
    %v2154 = vadd.f32 %v2002, %v2153
    %v2155 = vpop.f32.mrb[0].mxu0
    %2156 = vmatprep.mubr.bf16.mxu0 %v594
    %2157 = vmatmul.mubr.bf16.gmra.mrb[0].mxu0 %v593
    %v2158 = vpop.f32.mrb[0].mxu0
    %v2159 = vadd.f32 %v2002, %v2158
    %v2160 = vpop.f32.mrb[0].mxu0
    %v2161 = vpop.f32.mrb[0].mxu0
    %v2162 = vadd.f32 %v2002, %v2161
    %v2163 = vpop.f32.mrb[0].mxu0
    %2164 = vdwg.mxu0
    %v2165 = vmax.f32 %v2039, 0.0
    %v2166 = vmax.f32 %v2042, 0.0
    %v2167 = vmax.f32 %v2047, 0.0
    %v2168 = vmax.f32 %v2050, 0.0
    %v2169 = vmax.f32 %v2055, 0.0
    %v2170 = vmax.f32 %v2058, 0.0
    %v2171 = vmax.f32 %v2063, 0.0
    %v2172 = vmax.f32 %v2066, 0.0
    %v2173 = vmax.f32 %v2071, 0.0
    %v2174 = vmax.f32 %v2074, 0.0
    %v2175 = vmax.f32 %v2079, 0.0
    %v2176 = vmax.f32 %v2082, 0.0
    %v2177 = vmax.f32 %v2087, 0.0
    %v2178 = vmax.f32 %v2090, 0.0
    %v2179 = vmax.f32 %v2095, 0.0
    %v2180 = vmax.f32 %v2098, 0.0
    %v2181 = vmax.f32 %v2103, 0.0
    %v2182 = vmax.f32 %v2106, 0.0
    %v2183 = vmax.f32 %v2111, 0.0
    %v2184 = vmax.f32 %v2114, 0.0
    %v2185 = vmax.f32 %v2119, 0.0
    %v2186 = vmax.f32 %v2122, 0.0
    %v2187 = vmax.f32 %v2127, 0.0
    %v2188 = vmax.f32 %v2130, 0.0
    %v2189 = vmax.f32 %v2135, 0.0
    %v2190 = vmax.f32 %v2138, 0.0
    %v2191 = vmax.f32 %v2143, 0.0
    %v2192 = vmax.f32 %v2146, 0.0
    %v2193 = vmax.f32 %v2151, 0.0
    %v2194 = vmax.f32 %v2154, 0.0
    %v2195 = vmax.f32 %v2159, 0.0
    %v2196 = vmax.f32 %v2162, 0.0
    %v2197 = vpack.c.bf16 %v2166, %v2165
    %v2198 = vpack.c.bf16 %v2168, %v2167
    %v2199 = vpack.c.bf16 %v2170, %v2169
    %v2200 = vpack.c.bf16 %v2172, %v2171
    %v2201 = vpack.c.bf16 %v2174, %v2173
    %v2202 = vpack.c.bf16 %v2176, %v2175
    %v2203 = vpack.c.bf16 %v2178, %v2177
    %v2204 = vpack.c.bf16 %v2180, %v2179
    %v2205 = vpack.c.bf16 %v2182, %v2181
    %v2206 = vpack.c.bf16 %v2184, %v2183
    %v2207 = vpack.c.bf16 %v2186, %v2185
    %v2208 = vpack.c.bf16 %v2188, %v2187
    %v2209 = vpack.c.bf16 %v2190, %v2189
    %v2210 = vpack.c.bf16 %v2192, %v2191
    %v2211 = vpack.c.bf16 %v2194, %v2193
    %v2212 = vpack.c.bf16 %v2196, %v2195
    %s2213 = scalar_lea.vmem [#allocation6], 256
    %v2214 = vld [vmem:[%s2213] sm:$0xf]
    %v2215 = vld [vmem:[%s2213 + $0x4] sm:$0xf]
    %v2216 = vld [vmem:[%s2213 + $0x8] sm:$0xf]
    %v2217 = vld [vmem:[%s2213 + $0xc] sm:$0xf]
    %v2218 = vld [vmem:[%s2213 + $0x10] sm:$0xf]
    %v2219 = vld [vmem:[%s2213 + $0x14] sm:$0xf]
    %v2220 = vld [vmem:[%s2213 + $0x18] sm:$0xf]
    %v2221 = vld [vmem:[%s2213 + $0x1c] sm:$0xf]
    %v2222 = vld [vmem:[%s2213 + $0x20] sm:$0xf]
    %v2223 = vld [vmem:[%s2213 + $0x24] sm:$0xf]
    %v2224 = vld [vmem:[%s2213 + $0x28] sm:$0xf]
    %v2225 = vld [vmem:[%s2213 + $0x2c] sm:$0xf]
    %v2226 = vld [vmem:[%s2213 + $0x30] sm:$0xf]
    %v2227 = vld [vmem:[%s2213 + $0x34] sm:$0xf]
    %v2228 = vld [vmem:[%s2213 + $0x38] sm:$0xf]
    %v2229 = vld [vmem:[%s2213 + $0x3c] sm:$0xf]
    %v2246 = vunpack.c.l.b16 %v2214
    %v2247 = vunpack.c.l.b16 %v2215
    %v2248 = vunpack.c.l.b16 %v2216
    %v2249 = vunpack.c.l.b16 %v2217
    %v2250 = vunpack.c.l.b16 %v2218
    %v2251 = vunpack.c.l.b16 %v2219
    %v2252 = vunpack.c.l.b16 %v2220
    %v2253 = vunpack.c.l.b16 %v2221
    %v2254 = vunpack.c.l.b16 %v2222
    %v2255 = vunpack.c.l.b16 %v2223
    %v2256 = vunpack.c.l.b16 %v2224
    %v2257 = vunpack.c.l.b16 %v2225
    %v2258 = vunpack.c.l.b16 %v2226
    %v2259 = vunpack.c.l.b16 %v2227
    %v2260 = vunpack.c.l.b16 %v2228
    %v2261 = vunpack.c.l.b16 %v2229
    %v2262 = vpack.c.b16 %v2247, %v2246
    %v2263 = vpack.c.b16 %v2249, %v2248
    %v2264 = vpack.c.b16 %v2251, %v2250
    %v2265 = vpack.c.b16 %v2253, %v2252
    %v2266 = vpack.c.b16 %v2255, %v2254
    %v2267 = vpack.c.b16 %v2257, %v2256
    %v2268 = vpack.c.b16 %v2259, %v2258
    %v2269 = vpack.c.b16 %v2261, %v2260
    %2278 = vmatprep.subr.bf16.mxu0 0
    %2279 = vmatpush1.bf16.msra.mxu0 %v2262
    %2280 = vmatprep.subr.bf16.mxu0 0
    %2281 = vmatpush1.bf16.msra.mxu0 %v2263
    %2282 = vmatprep.subr.bf16.mxu0 0
    %2283 = vmatpush1.bf16.msra.mxu0 %v2264
    %2284 = vmatprep.subr.bf16.mxu0 0
    %2285 = vmatpush1.bf16.msra.mxu0 %v2265
    %2286 = vmatprep.subr.bf16.mxu0 0
    %2287 = vmatpush1.bf16.msra.mxu0 %v2266
    %2288 = vmatprep.subr.bf16.mxu0 0
    %2289 = vmatpush1.bf16.msra.mxu0 %v2267
    %2290 = vmatprep.subr.bf16.mxu0 0
    %2291 = vmatpush1.bf16.msra.mxu0 %v2268
    %2292 = vmatprep.subr.bf16.mxu0 0
    %2293 = vmatpush1.bf16.msra.mxu0 %v2269
    %2294 = vmatprep.subr.bf16.mxu0 0
    %2295 = vmatpush1.bf16.msra.mxu0 0
    %2296 = vmatprep.subr.bf16.mxu0 0
    %2297 = vmatpush1.bf16.msra.mxu0 0
    %2298 = vmatprep.subr.bf16.mxu0 0
    %2299 = vmatpush1.bf16.msra.mxu0 0
    %2300 = vmatprep.subr.bf16.mxu0 0
    %2301 = vmatpush1.bf16.msra.mxu0 0
    %2302 = vmatprep.subr.bf16.mxu0 0
    %2303 = vmatpush1.bf16.msra.mxu0 0
    %2304 = vmatprep.subr.bf16.mxu0 0
    %2305 = vmatpush1.bf16.msra.mxu0 0
    %2306 = vmatprep.subr.bf16.mxu0 0
    %2307 = vmatpush1.bf16.msra.mxu0 0
    %2308 = vmatprep.subr.bf16.mxu0 0
    %2309 = vmatpush1.bf16.msra.mxu0 0
    %2310 = vmatprep.mubr.bf16.mxu0 0
    %2311 = vmatmul.mubr.bf16.gmra.mrb[0].mxu0 %v2197
    %v2312 = vpop.f32.mrb[0].mxu0
    %v2313 = vadd.f32 0.0, %v2312
    %v2314 = vpop.f32.mrb[0].mxu0
    %v2315 = vpop.f32.mrb[0].mxu0
    %v2316 = vadd.f32 0.0, %v2315
    %v2317 = vpop.f32.mrb[0].mxu0
    %2318 = vmatprep.mubr.bf16.mxu0 0
    %2319 = vmatmul.mubr.bf16.gmra.mrb[0].mxu0 %v2198
    %v2320 = vpop.f32.mrb[0].mxu0
    %v2321 = vadd.f32 0.0, %v2320
    %v2322 = vpop.f32.mrb[0].mxu0
    %v2323 = vpop.f32.mrb[0].mxu0
    %v2324 = vadd.f32 0.0, %v2323
    %v2325 = vpop.f32.mrb[0].mxu0
    %2326 = vmatprep.mubr.bf16.mxu0 0
    %2327 = vmatmul.mubr.bf16.gmra.mrb[0].mxu0 %v2199
    %v2328 = vpop.f32.mrb[0].mxu0
    %v2329 = vadd.f32 0.0, %v2328
    %v2330 = vpop.f32.mrb[0].mxu0
    %v2331 = vpop.f32.mrb[0].mxu0
    %v2332 = vadd.f32 0.0, %v2331
    %v2333 = vpop.f32.mrb[0].mxu0
    %2334 = vmatprep.mubr.bf16.mxu0 0
    %2335 = vmatmul.mubr.bf16.gmra.mrb[0].mxu0 %v2200
    %v2336 = vpop.f32.mrb[0].mxu0
    %v2337 = vadd.f32 0.0, %v2336
    %v2338 = vpop.f32.mrb[0].mxu0
    %v2339 = vpop.f32.mrb[0].mxu0
    %v2340 = vadd.f32 0.0, %v2339
    %v2341 = vpop.f32.mrb[0].mxu0
    %2342 = vmatprep.mubr.bf16.mxu0 0
    %2343 = vmatmul.mubr.bf16.gmra.mrb[0].mxu0 %v2201
    %v2344 = vpop.f32.mrb[0].mxu0
    %v2345 = vadd.f32 0.0, %v2344
    %v2346 = vpop.f32.mrb[0].mxu0
    %v2347 = vpop.f32.mrb[0].mxu0
    %v2348 = vadd.f32 0.0, %v2347
    %v2349 = vpop.f32.mrb[0].mxu0
    %2350 = vmatprep.mubr.bf16.mxu0 0
    %2351 = vmatmul.mubr.bf16.gmra.mrb[0].mxu0 %v2202
    %v2352 = vpop.f32.mrb[0].mxu0
    %v2353 = vadd.f32 0.0, %v2352
    %v2354 = vpop.f32.mrb[0].mxu0
    %v2355 = vpop.f32.mrb[0].mxu0
    %v2356 = vadd.f32 0.0, %v2355
    %v2357 = vpop.f32.mrb[0].mxu0
    %2358 = vmatprep.mubr.bf16.mxu0 0
    %2359 = vmatmul.mubr.bf16.gmra.mrb[0].mxu0 %v2203
    %v2360 = vpop.f32.mrb[0].mxu0
    %v2361 = vadd.f32 0.0, %v2360
    %v2362 = vpop.f32.mrb[0].mxu0
    %v2363 = vpop.f32.mrb[0].mxu0
    %v2364 = vadd.f32 0.0, %v2363
    %v2365 = vpop.f32.mrb[0].mxu0
    %2366 = vmatprep.mubr.bf16.mxu0 0
    %2367 = vmatmul.mubr.bf16.gmra.mrb[0].mxu0 %v2204
    %v2368 = vpop.f32.mrb[0].mxu0
    %v2369 = vadd.f32 0.0, %v2368
    %v2370 = vpop.f32.mrb[0].mxu0
    %v2371 = vpop.f32.mrb[0].mxu0
    %v2372 = vadd.f32 0.0, %v2371
    %v2373 = vpop.f32.mrb[0].mxu0
    %2374 = vmatprep.mubr.bf16.mxu0 0
    %2375 = vmatmul.mubr.bf16.gmra.mrb[0].mxu0 %v2205
    %v2376 = vpop.f32.mrb[0].mxu0
    %v2377 = vadd.f32 0.0, %v2376
    %v2378 = vpop.f32.mrb[0].mxu0
    %v2379 = vpop.f32.mrb[0].mxu0
    %v2380 = vadd.f32 0.0, %v2379
    %v2381 = vpop.f32.mrb[0].mxu0
    %2382 = vmatprep.mubr.bf16.mxu0 0
    %2383 = vmatmul.mubr.bf16.gmra.mrb[0].mxu0 %v2206
    %v2384 = vpop.f32.mrb[0].mxu0
    %v2385 = vadd.f32 0.0, %v2384
    %v2386 = vpop.f32.mrb[0].mxu0
    %v2387 = vpop.f32.mrb[0].mxu0
    %v2388 = vadd.f32 0.0, %v2387
    %v2389 = vpop.f32.mrb[0].mxu0
    %2390 = vmatprep.mubr.bf16.mxu0 0
    %2391 = vmatmul.mubr.bf16.gmra.mrb[0].mxu0 %v2207
    %v2392 = vpop.f32.mrb[0].mxu0
    %v2393 = vadd.f32 0.0, %v2392
    %v2394 = vpop.f32.mrb[0].mxu0
    %v2395 = vpop.f32.mrb[0].mxu0
    %v2396 = vadd.f32 0.0, %v2395
    %v2397 = vpop.f32.mrb[0].mxu0
    %2398 = vmatprep.mubr.bf16.mxu0 0
    %2399 = vmatmul.mubr.bf16.gmra.mrb[0].mxu0 %v2208
    %v2400 = vpop.f32.mrb[0].mxu0
    %v2401 = vadd.f32 0.0, %v2400
    %v2402 = vpop.f32.mrb[0].mxu0
    %v2403 = vpop.f32.mrb[0].mxu0
    %v2404 = vadd.f32 0.0, %v2403
    %v2405 = vpop.f32.mrb[0].mxu0
    %2406 = vmatprep.mubr.bf16.mxu0 0
    %2407 = vmatmul.mubr.bf16.gmra.mrb[0].mxu0 %v2209
    %v2408 = vpop.f32.mrb[0].mxu0
    %v2409 = vadd.f32 0.0, %v2408
    %v2410 = vpop.f32.mrb[0].mxu0
    %v2411 = vpop.f32.mrb[0].mxu0
    %v2412 = vadd.f32 0.0, %v2411
    %v2413 = vpop.f32.mrb[0].mxu0
    %2414 = vmatprep.mubr.bf16.mxu0 0
    %2415 = vmatmul.mubr.bf16.gmra.mrb[0].mxu0 %v2210
    %v2416 = vpop.f32.mrb[0].mxu0
    %v2417 = vadd.f32 0.0, %v2416
    %v2418 = vpop.f32.mrb[0].mxu0
    %v2419 = vpop.f32.mrb[0].mxu0
    %v2420 = vadd.f32 0.0, %v2419
    %v2421 = vpop.f32.mrb[0].mxu0
    %2422 = vmatprep.mubr.bf16.mxu0 0
    %2423 = vmatmul.mubr.bf16.gmra.mrb[0].mxu0 %v2211
    %v2424 = vpop.f32.mrb[0].mxu0
    %v2425 = vadd.f32 0.0, %v2424
    %v2426 = vpop.f32.mrb[0].mxu0
    %v2427 = vpop.f32.mrb[0].mxu0
    %v2428 = vadd.f32 0.0, %v2427
    %v2429 = vpop.f32.mrb[0].mxu0
    %2430 = vmatprep.mubr.bf16.mxu0 0
    %2431 = vmatmul.mubr.bf16.gmra.mrb[0].mxu0 %v2212
    %v2432 = vpop.f32.mrb[0].mxu0
    %v2433 = vadd.f32 0.0, %v2432
    %v2434 = vpop.f32.mrb[0].mxu0
    %v2435 = vpop.f32.mrb[0].mxu0
    %v2436 = vadd.f32 0.0, %v2435
    %v2437 = vpop.f32.mrb[0].mxu0
    %2438 = vdwg.mxu0
    %v2439 = vpack.c.bf16 %v2316, %v2313
    %v2440 = vpack.c.bf16 %v2324, %v2321
    %v2441 = vpack.c.bf16 %v2332, %v2329
    %v2442 = vpack.c.bf16 %v2340, %v2337
    %v2443 = vpack.c.bf16 %v2348, %v2345
    %v2444 = vpack.c.bf16 %v2356, %v2353
    %v2445 = vpack.c.bf16 %v2364, %v2361
    %v2446 = vpack.c.bf16 %v2372, %v2369
    %v2447 = vpack.c.bf16 %v2380, %v2377
    %v2448 = vpack.c.bf16 %v2388, %v2385
    %v2449 = vpack.c.bf16 %v2396, %v2393
    %v2450 = vpack.c.bf16 %v2404, %v2401
    %v2451 = vpack.c.bf16 %v2412, %v2409
    %v2452 = vpack.c.bf16 %v2420, %v2417
    %v2453 = vpack.c.bf16 %v2428, %v2425
    %v2454 = vpack.c.bf16 %v2436, %v2433
    %s2455 = scalar_lea.vmem %s3, 4
    %v2456 = vld [vmem:[%s2455] sm:$0x1]
    %v2458 = vlaneseq
    %v2459 = vshrl.u32 %v2458, 7
    %v2460 = vsub.s32 0, %v2459
    %v2461 = vrot.slane %v2456, %v2460
    %2463 = vmatprep.subr.bf16.mxu0 0
    %2464 = vmatpush1.bf16.msra.mxu0 %v2439
    %2465 = vmatprep.subr.bf16.mxu0 0
    %2466 = vmatpush1.bf16.msra.mxu0 %v2440
    %2467 = vmatprep.subr.bf16.mxu0 0
    %2468 = vmatpush1.bf16.msra.mxu0 %v2441
    %2469 = vmatprep.subr.bf16.mxu0 0
    %2470 = vmatpush1.bf16.msra.mxu0 %v2442
    %2471 = vmatprep.subr.bf16.mxu0 0
    %2472 = vmatpush1.bf16.msra.mxu0 %v2443
    %2473 = vmatprep.subr.bf16.mxu0 0
    %2474 = vmatpush1.bf16.msra.mxu0 %v2444
    %2475 = vmatprep.subr.bf16.mxu0 0
    %2476 = vmatpush1.bf16.msra.mxu0 %v2445
    %2477 = vmatprep.subr.bf16.mxu0 0
    %2478 = vmatpush1.bf16.msra.mxu0 %v2446
    %2479 = vmatprep.subr.bf16.mxu0 0
    %2480 = vmatpush1.bf16.msra.mxu0 %v2447
    %2481 = vmatprep.subr.bf16.mxu0 0
    %2482 = vmatpush1.bf16.msra.mxu0 %v2448
    %2483 = vmatprep.subr.bf16.mxu0 0
    %2484 = vmatpush1.bf16.msra.mxu0 %v2449
    %2485 = vmatprep.subr.bf16.mxu0 0
    %2486 = vmatpush1.bf16.msra.mxu0 %v2450
    %2487 = vmatprep.subr.bf16.mxu0 0
    %2488 = vmatpush1.bf16.msra.mxu0 %v2451
    %2489 = vmatprep.subr.bf16.mxu0 0
    %2490 = vmatpush1.bf16.msra.mxu0 %v2452
    %2491 = vmatprep.subr.bf16.mxu0 0
    %2492 = vmatpush1.bf16.msra.mxu0 %v2453
    %2493 = vmatprep.subr.bf16.mxu0 0
    %2494 = vmatpush1.bf16.msra.mxu0 %v2454
    %2495 = vmatprep.mubr.bf16.mxu0 %v564
    %2496 = vmatmul.mubr.bf16.gmra.mrb[0].mxu0 %v563
    %v2497 = vpop.f32.mrb[0].mxu0
    %v2498 = vadd.f32 %v2461, %v2497
    %v2499 = vpop.f32.mrb[0].mxu0
    %v2500 = vpop.f32.mrb[0].mxu0
    %v2501 = vadd.f32 %v2461, %v2500
    %v2502 = vpop.f32.mrb[0].mxu0
    %2503 = vmatprep.mubr.bf16.mxu0 %v566
    %2504 = vmatmul.mubr.bf16.gmra.mrb[0].mxu0 %v565
    %v2505 = vpop.f32.mrb[0].mxu0
    %v2506 = vadd.f32 %v2461, %v2505
    %v2507 = vpop.f32.mrb[0].mxu0
    %v2508 = vpop.f32.mrb[0].mxu0
    %v2509 = vadd.f32 %v2461, %v2508
    %v2510 = vpop.f32.mrb[0].mxu0
    %2511 = vmatprep.mubr.bf16.mxu0 %v568
    %2512 = vmatmul.mubr.bf16.gmra.mrb[0].mxu0 %v567
    %v2513 = vpop.f32.mrb[0].mxu0
    %v2514 = vadd.f32 %v2461, %v2513
    %v2515 = vpop.f32.mrb[0].mxu0
    %v2516 = vpop.f32.mrb[0].mxu0
    %v2517 = vadd.f32 %v2461, %v2516
    %v2518 = vpop.f32.mrb[0].mxu0
    %2519 = vmatprep.mubr.bf16.mxu0 %v570
    %2520 = vmatmul.mubr.bf16.gmra.mrb[0].mxu0 %v569
    %v2521 = vpop.f32.mrb[0].mxu0
    %v2522 = vadd.f32 %v2461, %v2521
    %v2523 = vpop.f32.mrb[0].mxu0
    %v2524 = vpop.f32.mrb[0].mxu0
    %v2525 = vadd.f32 %v2461, %v2524
    %v2526 = vpop.f32.mrb[0].mxu0
    %2527 = vmatprep.mubr.bf16.mxu0 %v572
    %2528 = vmatmul.mubr.bf16.gmra.mrb[0].mxu0 %v571
    %v2529 = vpop.f32.mrb[0].mxu0
    %v2530 = vadd.f32 %v2461, %v2529
    %v2531 = vpop.f32.mrb[0].mxu0
    %v2532 = vpop.f32.mrb[0].mxu0
    %v2533 = vadd.f32 %v2461, %v2532
    %v2534 = vpop.f32.mrb[0].mxu0
    %2535 = vmatprep.mubr.bf16.mxu0 %v574
    %2536 = vmatmul.mubr.bf16.gmra.mrb[0].mxu0 %v573
    %v2537 = vpop.f32.mrb[0].mxu0
    %v2538 = vadd.f32 %v2461, %v2537
    %v2539 = vpop.f32.mrb[0].mxu0
    %v2540 = vpop.f32.mrb[0].mxu0
    %v2541 = vadd.f32 %v2461, %v2540
    %v2542 = vpop.f32.mrb[0].mxu0
    %2543 = vmatprep.mubr.bf16.mxu0 %v576
    %2544 = vmatmul.mubr.bf16.gmra.mrb[0].mxu0 %v575
    %v2545 = vpop.f32.mrb[0].mxu0
    %v2546 = vadd.f32 %v2461, %v2545
    %v2547 = vpop.f32.mrb[0].mxu0
    %v2548 = vpop.f32.mrb[0].mxu0
    %v2549 = vadd.f32 %v2461, %v2548
    %v2550 = vpop.f32.mrb[0].mxu0
    %2551 = vmatprep.mubr.bf16.mxu0 %v578
    %2552 = vmatmul.mubr.bf16.gmra.mrb[0].mxu0 %v577
    %v2553 = vpop.f32.mrb[0].mxu0
    %v2554 = vadd.f32 %v2461, %v2553
    %v2555 = vpop.f32.mrb[0].mxu0
    %v2556 = vpop.f32.mrb[0].mxu0
    %v2557 = vadd.f32 %v2461, %v2556
    %v2558 = vpop.f32.mrb[0].mxu0
    %2559 = vmatprep.mubr.bf16.mxu0 %v580
    %2560 = vmatmul.mubr.bf16.gmra.mrb[0].mxu0 %v579
    %v2561 = vpop.f32.mrb[0].mxu0
    %v2562 = vadd.f32 %v2461, %v2561
    %v2563 = vpop.f32.mrb[0].mxu0
    %v2564 = vpop.f32.mrb[0].mxu0
    %v2565 = vadd.f32 %v2461, %v2564
    %v2566 = vpop.f32.mrb[0].mxu0
    %2567 = vmatprep.mubr.bf16.mxu0 %v582
    %2568 = vmatmul.mubr.bf16.gmra.mrb[0].mxu0 %v581
    %v2569 = vpop.f32.mrb[0].mxu0
    %v2570 = vadd.f32 %v2461, %v2569
    %v2571 = vpop.f32.mrb[0].mxu0
    %v2572 = vpop.f32.mrb[0].mxu0
    %v2573 = vadd.f32 %v2461, %v2572
    %v2574 = vpop.f32.mrb[0].mxu0
    %2575 = vmatprep.mubr.bf16.mxu0 %v584
    %2576 = vmatmul.mubr.bf16.gmra.mrb[0].mxu0 %v583
    %v2577 = vpop.f32.mrb[0].mxu0
    %v2578 = vadd.f32 %v2461, %v2577
    %v2579 = vpop.f32.mrb[0].mxu0
    %v2580 = vpop.f32.mrb[0].mxu0
    %v2581 = vadd.f32 %v2461, %v2580
    %v2582 = vpop.f32.mrb[0].mxu0
    %2583 = vmatprep.mubr.bf16.mxu0 %v586
    %2584 = vmatmul.mubr.bf16.gmra.mrb[0].mxu0 %v585
    %v2585 = vpop.f32.mrb[0].mxu0
    %v2586 = vadd.f32 %v2461, %v2585
    %v2587 = vpop.f32.mrb[0].mxu0
    %v2588 = vpop.f32.mrb[0].mxu0
    %v2589 = vadd.f32 %v2461, %v2588
    %v2590 = vpop.f32.mrb[0].mxu0
    %2591 = vmatprep.mubr.bf16.mxu0 %v588
    %2592 = vmatmul.mubr.bf16.gmra.mrb[0].mxu0 %v587
    %v2593 = vpop.f32.mrb[0].mxu0
    %v2594 = vadd.f32 %v2461, %v2593
    %v2595 = vpop.f32.mrb[0].mxu0
    %v2596 = vpop.f32.mrb[0].mxu0
    %v2597 = vadd.f32 %v2461, %v2596
    %v2598 = vpop.f32.mrb[0].mxu0
    %2599 = vmatprep.mubr.bf16.mxu0 %v590
    %2600 = vmatmul.mubr.bf16.gmra.mrb[0].mxu0 %v589
    %v2601 = vpop.f32.mrb[0].mxu0
    %v2602 = vadd.f32 %v2461, %v2601
    %v2603 = vpop.f32.mrb[0].mxu0
    %v2604 = vpop.f32.mrb[0].mxu0
    %v2605 = vadd.f32 %v2461, %v2604
    %v2606 = vpop.f32.mrb[0].mxu0
    %2607 = vmatprep.mubr.bf16.mxu0 %v592
    %2608 = vmatmul.mubr.bf16.gmra.mrb[0].mxu0 %v591
    %v2609 = vpop.f32.mrb[0].mxu0
    %v2610 = vadd.f32 %v2461, %v2609
    %v2611 = vpop.f32.mrb[0].mxu0
    %v2612 = vpop.f32.mrb[0].mxu0
    %v2613 = vadd.f32 %v2461, %v2612
    %v2614 = vpop.f32.mrb[0].mxu0
    %2615 = vmatprep.mubr.bf16.mxu0 %v594
    %2616 = vmatmul.mubr.bf16.gmra.mrb[0].mxu0 %v593
    %v2617 = vpop.f32.mrb[0].mxu0
    %v2618 = vadd.f32 %v2461, %v2617
    %v2619 = vpop.f32.mrb[0].mxu0
    %v2620 = vpop.f32.mrb[0].mxu0
    %v2621 = vadd.f32 %v2461, %v2620
    %v2622 = vpop.f32.mrb[0].mxu0
    %2623 = vdwg.mxu0
    %v2624 = vmax.f32 %v2498, 0.0
    %v2625 = vmax.f32 %v2501, 0.0
    %v2626 = vmax.f32 %v2506, 0.0
    %v2627 = vmax.f32 %v2509, 0.0
    %v2628 = vmax.f32 %v2514, 0.0
    %v2629 = vmax.f32 %v2517, 0.0
    %v2630 = vmax.f32 %v2522, 0.0
    %v2631 = vmax.f32 %v2525, 0.0
    %v2632 = vmax.f32 %v2530, 0.0
    %v2633 = vmax.f32 %v2533, 0.0
    %v2634 = vmax.f32 %v2538, 0.0
    %v2635 = vmax.f32 %v2541, 0.0
    %v2636 = vmax.f32 %v2546, 0.0
    %v2637 = vmax.f32 %v2549, 0.0
    %v2638 = vmax.f32 %v2554, 0.0
    %v2639 = vmax.f32 %v2557, 0.0
    %v2640 = vmax.f32 %v2562, 0.0
    %v2641 = vmax.f32 %v2565, 0.0
    %v2642 = vmax.f32 %v2570, 0.0
    %v2643 = vmax.f32 %v2573, 0.0
    %v2644 = vmax.f32 %v2578, 0.0
    %v2645 = vmax.f32 %v2581, 0.0
    %v2646 = vmax.f32 %v2586, 0.0
    %v2647 = vmax.f32 %v2589, 0.0
    %v2648 = vmax.f32 %v2594, 0.0
    %v2649 = vmax.f32 %v2597, 0.0
    %v2650 = vmax.f32 %v2602, 0.0
    %v2651 = vmax.f32 %v2605, 0.0
    %v2652 = vmax.f32 %v2610, 0.0
    %v2653 = vmax.f32 %v2613, 0.0
    %v2654 = vmax.f32 %v2618, 0.0
    %v2655 = vmax.f32 %v2621, 0.0
    %v2656 = vpack.c.bf16 %v2625, %v2624
    %v2657 = vpack.c.bf16 %v2627, %v2626
    %v2658 = vpack.c.bf16 %v2629, %v2628
    %v2659 = vpack.c.bf16 %v2631, %v2630
    %v2660 = vpack.c.bf16 %v2633, %v2632
    %v2661 = vpack.c.bf16 %v2635, %v2634
    %v2662 = vpack.c.bf16 %v2637, %v2636
    %v2663 = vpack.c.bf16 %v2639, %v2638
    %v2664 = vpack.c.bf16 %v2641, %v2640
    %v2665 = vpack.c.bf16 %v2643, %v2642
    %v2666 = vpack.c.bf16 %v2645, %v2644
    %v2667 = vpack.c.bf16 %v2647, %v2646
    %v2668 = vpack.c.bf16 %v2649, %v2648
    %v2669 = vpack.c.bf16 %v2651, %v2650
    %v2670 = vpack.c.bf16 %v2653, %v2652
    %v2671 = vpack.c.bf16 %v2655, %v2654
    %s2672 = scalar_lea.vmem [#allocation6], 320
    %v2673 = vld [vmem:[%s2672] sm:$0xf]
    %v2674 = vld [vmem:[%s2672 + $0x4] sm:$0xf]
    %v2675 = vld [vmem:[%s2672 + $0x8] sm:$0xf]
    %v2676 = vld [vmem:[%s2672 + $0xc] sm:$0xf]
    %v2677 = vld [vmem:[%s2672 + $0x10] sm:$0xf]
    %v2678 = vld [vmem:[%s2672 + $0x14] sm:$0xf]
    %v2679 = vld [vmem:[%s2672 + $0x18] sm:$0xf]
    %v2680 = vld [vmem:[%s2672 + $0x1c] sm:$0xf]
    %v2681 = vld [vmem:[%s2672 + $0x20] sm:$0xf]
    %v2682 = vld [vmem:[%s2672 + $0x24] sm:$0xf]
    %v2683 = vld [vmem:[%s2672 + $0x28] sm:$0xf]
    %v2684 = vld [vmem:[%s2672 + $0x2c] sm:$0xf]
    %v2685 = vld [vmem:[%s2672 + $0x30] sm:$0xf]
    %v2686 = vld [vmem:[%s2672 + $0x34] sm:$0xf]
    %v2687 = vld [vmem:[%s2672 + $0x38] sm:$0xf]
    %v2688 = vld [vmem:[%s2672 + $0x3c] sm:$0xf]
    %s2689 = scalar_lea.vmem %s3, 5
    %v2690 = vld [vmem:[%s2689] sm:$0x1]
    %v2692 = vlaneseq
    %v2693 = vshrl.u32 %v2692, 7
    %v2694 = vsub.s32 0, %v2693
    %v2695 = vrot.slane %v2690, %v2694
    %v2713 = vunpack.c.l.b16 %v2673
    %v2714 = vunpack.c.l.b16 %v2674
    %v2715 = vunpack.c.l.b16 %v2675
    %v2716 = vunpack.c.l.b16 %v2676
    %v2717 = vunpack.c.l.b16 %v2677
    %v2718 = vunpack.c.l.b16 %v2678
    %v2719 = vunpack.c.l.b16 %v2679
    %v2720 = vunpack.c.l.b16 %v2680
    %v2721 = vunpack.c.l.b16 %v2681
    %v2722 = vunpack.c.l.b16 %v2682
    %v2723 = vunpack.c.l.b16 %v2683
    %v2724 = vunpack.c.l.b16 %v2684
    %v2725 = vunpack.c.l.b16 %v2685
    %v2726 = vunpack.c.l.b16 %v2686
    %v2727 = vunpack.c.l.b16 %v2687
    %v2728 = vunpack.c.l.b16 %v2688
    %v2729 = vpack.c.b16 %v2714, %v2713
    %v2730 = vpack.c.b16 %v2716, %v2715
    %v2731 = vpack.c.b16 %v2718, %v2717
    %v2732 = vpack.c.b16 %v2720, %v2719
    %v2733 = vpack.c.b16 %v2722, %v2721
    %v2734 = vpack.c.b16 %v2724, %v2723
    %v2735 = vpack.c.b16 %v2726, %v2725
    %v2736 = vpack.c.b16 %v2728, %v2727
    %2745 = vmatprep.subr.bf16.mxu0 0
    %2746 = vmatpush1.bf16.msra.mxu0 %v2729
    %2747 = vmatprep.subr.bf16.mxu0 0
    %2748 = vmatpush1.bf16.msra.mxu0 %v2730
    %2749 = vmatprep.subr.bf16.mxu0 0
    %2750 = vmatpush1.bf16.msra.mxu0 %v2731
    %2751 = vmatprep.subr.bf16.mxu0 0
    %2752 = vmatpush1.bf16.msra.mxu0 %v2732
    %2753 = vmatprep.subr.bf16.mxu0 0
    %2754 = vmatpush1.bf16.msra.mxu0 %v2733
    %2755 = vmatprep.subr.bf16.mxu0 0
    %2756 = vmatpush1.bf16.msra.mxu0 %v2734
    %2757 = vmatprep.subr.bf16.mxu0 0
    %2758 = vmatpush1.bf16.msra.mxu0 %v2735
    %2759 = vmatprep.subr.bf16.mxu0 0
    %2760 = vmatpush1.bf16.msra.mxu0 %v2736
    %2761 = vmatprep.subr.bf16.mxu0 0
    %2762 = vmatpush1.bf16.msra.mxu0 0
    %2763 = vmatprep.subr.bf16.mxu0 0
    %2764 = vmatpush1.bf16.msra.mxu0 0
    %2765 = vmatprep.subr.bf16.mxu0 0
    %2766 = vmatpush1.bf16.msra.mxu0 0
    %2767 = vmatprep.subr.bf16.mxu0 0
    %2768 = vmatpush1.bf16.msra.mxu0 0
    %2769 = vmatprep.subr.bf16.mxu0 0
    %2770 = vmatpush1.bf16.msra.mxu0 0
    %2771 = vmatprep.subr.bf16.mxu0 0
    %2772 = vmatpush1.bf16.msra.mxu0 0
    %2773 = vmatprep.subr.bf16.mxu0 0
    %2774 = vmatpush1.bf16.msra.mxu0 0
    %2775 = vmatprep.subr.bf16.mxu0 0
    %2776 = vmatpush1.bf16.msra.mxu0 0
    %2777 = vmatprep.mubr.bf16.mxu0 0
    %2778 = vmatmul.mubr.bf16.gmra.mrb[0].mxu0 %v2656
    %v2779 = vpop.f32.mrb[0].mxu0
    %v2780 = vadd.f32 %v2695, %v2779
    %v2781 = vpop.f32.mrb[0].mxu0
    %v2782 = vpop.f32.mrb[0].mxu0
    %v2783 = vadd.f32 %v2695, %v2782
    %v2784 = vpop.f32.mrb[0].mxu0
    %2785 = vmatprep.mubr.bf16.mxu0 0
    %2786 = vmatmul.mubr.bf16.gmra.mrb[0].mxu0 %v2657
    %v2787 = vpop.f32.mrb[0].mxu0
    %v2788 = vadd.f32 %v2695, %v2787
    %v2789 = vpop.f32.mrb[0].mxu0
    %v2790 = vpop.f32.mrb[0].mxu0
    %v2791 = vadd.f32 %v2695, %v2790
    %v2792 = vpop.f32.mrb[0].mxu0
    %2793 = vmatprep.mubr.bf16.mxu0 0
    %2794 = vmatmul.mubr.bf16.gmra.mrb[0].mxu0 %v2658
    %v2795 = vpop.f32.mrb[0].mxu0
    %v2796 = vadd.f32 %v2695, %v2795
    %v2797 = vpop.f32.mrb[0].mxu0
    %v2798 = vpop.f32.mrb[0].mxu0
    %v2799 = vadd.f32 %v2695, %v2798
    %v2800 = vpop.f32.mrb[0].mxu0
    %2801 = vmatprep.mubr.bf16.mxu0 0
    %2802 = vmatmul.mubr.bf16.gmra.mrb[0].mxu0 %v2659
    %v2803 = vpop.f32.mrb[0].mxu0
    %v2804 = vadd.f32 %v2695, %v2803
    %v2805 = vpop.f32.mrb[0].mxu0
    %v2806 = vpop.f32.mrb[0].mxu0
    %v2807 = vadd.f32 %v2695, %v2806
    %v2808 = vpop.f32.mrb[0].mxu0
    %2809 = vmatprep.mubr.bf16.mxu0 0
    %2810 = vmatmul.mubr.bf16.gmra.mrb[0].mxu0 %v2660
    %v2811 = vpop.f32.mrb[0].mxu0
    %v2812 = vadd.f32 %v2695, %v2811
    %v2813 = vpop.f32.mrb[0].mxu0
    %v2814 = vpop.f32.mrb[0].mxu0
    %v2815 = vadd.f32 %v2695, %v2814
    %v2816 = vpop.f32.mrb[0].mxu0
    %2817 = vmatprep.mubr.bf16.mxu0 0
    %2818 = vmatmul.mubr.bf16.gmra.mrb[0].mxu0 %v2661
    %v2819 = vpop.f32.mrb[0].mxu0
    %v2820 = vadd.f32 %v2695, %v2819
    %v2821 = vpop.f32.mrb[0].mxu0
    %v2822 = vpop.f32.mrb[0].mxu0
    %v2823 = vadd.f32 %v2695, %v2822
    %v2824 = vpop.f32.mrb[0].mxu0
    %2825 = vmatprep.mubr.bf16.mxu0 0
    %2826 = vmatmul.mubr.bf16.gmra.mrb[0].mxu0 %v2662
    %v2827 = vpop.f32.mrb[0].mxu0
    %v2828 = vadd.f32 %v2695, %v2827
    %v2829 = vpop.f32.mrb[0].mxu0
    %v2830 = vpop.f32.mrb[0].mxu0
    %v2831 = vadd.f32 %v2695, %v2830
    %v2832 = vpop.f32.mrb[0].mxu0
    %2833 = vmatprep.mubr.bf16.mxu0 0
    %2834 = vmatmul.mubr.bf16.gmra.mrb[0].mxu0 %v2663
    %v2835 = vpop.f32.mrb[0].mxu0
    %v2836 = vadd.f32 %v2695, %v2835
    %v2837 = vpop.f32.mrb[0].mxu0
    %v2838 = vpop.f32.mrb[0].mxu0
    %v2839 = vadd.f32 %v2695, %v2838
    %v2840 = vpop.f32.mrb[0].mxu0
    %2841 = vmatprep.mubr.bf16.mxu0 0
    %2842 = vmatmul.mubr.bf16.gmra.mrb[0].mxu0 %v2664
    %v2843 = vpop.f32.mrb[0].mxu0
    %v2844 = vadd.f32 %v2695, %v2843
    %v2845 = vpop.f32.mrb[0].mxu0
    %v2846 = vpop.f32.mrb[0].mxu0
    %v2847 = vadd.f32 %v2695, %v2846
    %v2848 = vpop.f32.mrb[0].mxu0
    %2849 = vmatprep.mubr.bf16.mxu0 0
    %2850 = vmatmul.mubr.bf16.gmra.mrb[0].mxu0 %v2665
    %v2851 = vpop.f32.mrb[0].mxu0
    %v2852 = vadd.f32 %v2695, %v2851
    %v2853 = vpop.f32.mrb[0].mxu0
    %v2854 = vpop.f32.mrb[0].mxu0
    %v2855 = vadd.f32 %v2695, %v2854
    %v2856 = vpop.f32.mrb[0].mxu0
    %2857 = vmatprep.mubr.bf16.mxu0 0
    %2858 = vmatmul.mubr.bf16.gmra.mrb[0].mxu0 %v2666
    %v2859 = vpop.f32.mrb[0].mxu0
    %v2860 = vadd.f32 %v2695, %v2859
    %v2861 = vpop.f32.mrb[0].mxu0
    %v2862 = vpop.f32.mrb[0].mxu0
    %v2863 = vadd.f32 %v2695, %v2862
    %v2864 = vpop.f32.mrb[0].mxu0
    %2865 = vmatprep.mubr.bf16.mxu0 0
    %2866 = vmatmul.mubr.bf16.gmra.mrb[0].mxu0 %v2667
    %v2867 = vpop.f32.mrb[0].mxu0
    %v2868 = vadd.f32 %v2695, %v2867
    %v2869 = vpop.f32.mrb[0].mxu0
    %v2870 = vpop.f32.mrb[0].mxu0
    %v2871 = vadd.f32 %v2695, %v2870
    %v2872 = vpop.f32.mrb[0].mxu0
    %2873 = vmatprep.mubr.bf16.mxu0 0
    %2874 = vmatmul.mubr.bf16.gmra.mrb[0].mxu0 %v2668
    %v2875 = vpop.f32.mrb[0].mxu0
    %v2876 = vadd.f32 %v2695, %v2875
    %v2877 = vpop.f32.mrb[0].mxu0
    %v2878 = vpop.f32.mrb[0].mxu0
    %v2879 = vadd.f32 %v2695, %v2878
    %v2880 = vpop.f32.mrb[0].mxu0
    %2881 = vmatprep.mubr.bf16.mxu0 0
    %2882 = vmatmul.mubr.bf16.gmra.mrb[0].mxu0 %v2669
    %v2883 = vpop.f32.mrb[0].mxu0
    %v2884 = vadd.f32 %v2695, %v2883
    %v2885 = vpop.f32.mrb[0].mxu0
    %v2886 = vpop.f32.mrb[0].mxu0
    %v2887 = vadd.f32 %v2695, %v2886
    %v2888 = vpop.f32.mrb[0].mxu0
    %2889 = vmatprep.mubr.bf16.mxu0 0
    %2890 = vmatmul.mubr.bf16.gmra.mrb[0].mxu0 %v2670
    %v2891 = vpop.f32.mrb[0].mxu0
    %v2892 = vadd.f32 %v2695, %v2891
    %v2893 = vpop.f32.mrb[0].mxu0
    %v2894 = vpop.f32.mrb[0].mxu0
    %v2895 = vadd.f32 %v2695, %v2894
    %v2896 = vpop.f32.mrb[0].mxu0
    %2897 = vmatprep.mubr.bf16.mxu0 0
    %2898 = vmatmul.mubr.bf16.gmra.mrb[0].mxu0 %v2671
    %v2899 = vpop.f32.mrb[0].mxu0
    %v2900 = vadd.f32 %v2695, %v2899
    %v2901 = vpop.f32.mrb[0].mxu0
    %v2902 = vpop.f32.mrb[0].mxu0
    %v2903 = vadd.f32 %v2695, %v2902
    %v2904 = vpop.f32.mrb[0].mxu0
    %2905 = vdwg.mxu0
    %v2906 = vpack.c.bf16 %v2783, %v2780
    %v2907 = vpack.c.bf16 %v2791, %v2788
    %v2908 = vpack.c.bf16 %v2799, %v2796
    %v2909 = vpack.c.bf16 %v2807, %v2804
    %v2910 = vpack.c.bf16 %v2815, %v2812
    %v2911 = vpack.c.bf16 %v2823, %v2820
    %v2912 = vpack.c.bf16 %v2831, %v2828
    %v2913 = vpack.c.bf16 %v2839, %v2836
    %v2914 = vpack.c.bf16 %v2847, %v2844
    %v2915 = vpack.c.bf16 %v2855, %v2852
    %v2916 = vpack.c.bf16 %v2863, %v2860
    %v2917 = vpack.c.bf16 %v2871, %v2868
    %v2918 = vpack.c.bf16 %v2879, %v2876
    %v2919 = vpack.c.bf16 %v2887, %v2884
    %v2920 = vpack.c.bf16 %v2895, %v2892
    %v2921 = vpack.c.bf16 %v2903, %v2900
    %v2938 = vunpack.c.l.b16 %v2906
    %v2939 = vunpack.c.h.b16 %v2906
    %v2940 = vunpack.c.l.b16 %v2907
    %v2941 = vunpack.c.h.b16 %v2907
    %v2942 = vunpack.c.l.b16 %v2908
    %v2943 = vunpack.c.h.b16 %v2908
    %v2944 = vunpack.c.l.b16 %v2909
    %v2945 = vunpack.c.h.b16 %v2909
    %v2946 = vunpack.c.l.b16 %v2910
    %v2947 = vunpack.c.h.b16 %v2910
    %v2948 = vunpack.c.l.b16 %v2911
    %v2949 = vunpack.c.h.b16 %v2911
    %v2950 = vunpack.c.l.b16 %v2912
    %v2951 = vunpack.c.h.b16 %v2912
    %v2952 = vunpack.c.l.b16 %v2913
    %v2953 = vunpack.c.h.b16 %v2913
    %v2954 = vunpack.c.l.b16 %v2914
    %v2955 = vunpack.c.h.b16 %v2914
    %v2956 = vunpack.c.l.b16 %v2915
    %v2957 = vunpack.c.h.b16 %v2915
    %v2958 = vunpack.c.l.b16 %v2916
    %v2959 = vunpack.c.h.b16 %v2916
    %v2960 = vunpack.c.l.b16 %v2917
    %v2961 = vunpack.c.h.b16 %v2917
    %v2962 = vunpack.c.l.b16 %v2918
    %v2963 = vunpack.c.h.b16 %v2918
    %v2964 = vunpack.c.l.b16 %v2919
    %v2965 = vunpack.c.h.b16 %v2919
    %v2966 = vunpack.c.l.b16 %v2920
    %v2967 = vunpack.c.h.b16 %v2920
    %v2968 = vunpack.c.l.b16 %v2921
    %v2969 = vunpack.c.h.b16 %v2921
    %v2970 = vpack.c.b16 %v2938, %v2938
    %v2971 = vpack.c.b16 %v2939, %v2939
    %v2972 = vpack.c.b16 %v2940, %v2940
    %v2973 = vpack.c.b16 %v2941, %v2941
    %v2974 = vpack.c.b16 %v2942, %v2942
    %v2975 = vpack.c.b16 %v2943, %v2943
    %v2976 = vpack.c.b16 %v2944, %v2944
    %v2977 = vpack.c.b16 %v2945, %v2945
    %v2978 = vpack.c.b16 %v2946, %v2946
    %v2979 = vpack.c.b16 %v2947, %v2947
    %v2980 = vpack.c.b16 %v2948, %v2948
    %v2981 = vpack.c.b16 %v2949, %v2949
    %v2982 = vpack.c.b16 %v2950, %v2950
    %v2983 = vpack.c.b16 %v2951, %v2951
    %v2984 = vpack.c.b16 %v2952, %v2952
    %v2985 = vpack.c.b16 %v2953, %v2953
    %v2986 = vpack.c.b16 %v2954, %v2954
    %v2987 = vpack.c.b16 %v2955, %v2955
    %v2988 = vpack.c.b16 %v2956, %v2956
    %v2989 = vpack.c.b16 %v2957, %v2957
    %v2990 = vpack.c.b16 %v2958, %v2958
    %v2991 = vpack.c.b16 %v2959, %v2959
    %v2992 = vpack.c.b16 %v2960, %v2960
    %v2993 = vpack.c.b16 %v2961, %v2961
    %v2994 = vpack.c.b16 %v2962, %v2962
    %v2995 = vpack.c.b16 %v2963, %v2963
    %v2996 = vpack.c.b16 %v2964, %v2964
    %v2997 = vpack.c.b16 %v2965, %v2965
    %v2998 = vpack.c.b16 %v2966, %v2966
    %v2999 = vpack.c.b16 %v2967, %v2967
    %v3000 = vpack.c.b16 %v2968, %v2968
    %v3001 = vpack.c.b16 %v2969, %v2969
    %3034 = vst [vmem:[%s4] sm:$0xf] %v2970
    %3035 = vst [vmem:[%s4 + $0x4] sm:$0xf] %v2971
    %3036 = vst [vmem:[%s4 + $0x8] sm:$0xf] %v2972
    %3037 = vst [vmem:[%s4 + $0xc] sm:$0xf] %v2973
    %3038 = vst [vmem:[%s4 + $0x10] sm:$0xf] %v2974
    %3039 = vst [vmem:[%s4 + $0x14] sm:$0xf] %v2975
    %3040 = vst [vmem:[%s4 + $0x18] sm:$0xf] %v2976
    %3041 = vst [vmem:[%s4 + $0x1c] sm:$0xf] %v2977
    %3042 = vst [vmem:[%s4 + $0x20] sm:$0xf] %v2978
    %3043 = vst [vmem:[%s4 + $0x24] sm:$0xf] %v2979
    %3044 = vst [vmem:[%s4 + $0x28] sm:$0xf] %v2980
    %3045 = vst [vmem:[%s4 + $0x2c] sm:$0xf] %v2981
    %3046 = vst [vmem:[%s4 + $0x30] sm:$0xf] %v2982
    %3047 = vst [vmem:[%s4 + $0x34] sm:$0xf] %v2983
    %3048 = vst [vmem:[%s4 + $0x38] sm:$0xf] %v2984
    %3049 = vst [vmem:[%s4 + $0x3c] sm:$0xf] %v2985
    %3050 = vst [vmem:[%s4 + $0x40] sm:$0xf] %v2986
    %3051 = vst [vmem:[%s4 + $0x44] sm:$0xf] %v2987
    %3052 = vst [vmem:[%s4 + $0x48] sm:$0xf] %v2988
    %3053 = vst [vmem:[%s4 + $0x4c] sm:$0xf] %v2989
    %3054 = vst [vmem:[%s4 + $0x50] sm:$0xf] %v2990
    %3055 = vst [vmem:[%s4 + $0x54] sm:$0xf] %v2991
    %3056 = vst [vmem:[%s4 + $0x58] sm:$0xf] %v2992
    %3057 = vst [vmem:[%s4 + $0x5c] sm:$0xf] %v2993
    %3058 = vst [vmem:[%s4 + $0x60] sm:$0xf] %v2994
    %3059 = vst [vmem:[%s4 + $0x64] sm:$0xf] %v2995
    %3060 = vst [vmem:[%s4 + $0x68] sm:$0xf] %v2996
    %3061 = vst [vmem:[%s4 + $0x6c] sm:$0xf] %v2997
    %3062 = vst [vmem:[%s4 + $0x70] sm:$0xf] %v2998
    %3063 = vst [vmem:[%s4 + $0x74] sm:$0xf] %v2999
    %3064 = vst [vmem:[%s4 + $0x78] sm:$0xf] %v3000
    %3065 = vst [vmem:[%s4 + $0x7c] sm:$0xf] %v3001
    // Predicated region
    $region30: #{net_forward.1} parent=1 // pred_check
      _
    $region31: #{net_forward.1} parent=1 // pred_check_branch
      %3067 = sbr.rel (0) target = $region33
    $region32: #{net_forward.1} parent=1 // pred_region
      _
    $region33: #{net_forward.1} parent=1 // pred_fallthru
      _
    // Predicated region
    $region34: #{net_forward.1} parent=1 // pred_check
      _
    $region35: #{net_forward.1} parent=1 // pred_check_branch
      %3069 = sbr.rel (0) target = $region37
    $region36: #{net_forward.1} parent=1 // pred_region
      _
    $region37: #{net_forward.1} parent=1 // pred_fallthru
      _
    %3070 = vsyncpa [#allocation3], 1
    %3071 = vsyncpa [#allocation5], 1

</llo_original>
